<compile_context>
chip_gen: v7x
topology: tpu7x:2x2x1
jax: 0.10.0
libtpu: 0.0.40
codegen_flags: <defaults>
</compile_context>

<pallas_src>
import functools

import jax
import jax.numpy as jnp
from jax import lax
from jax.experimental import pallas as pl
from jax.experimental.pallas import tpu as pltpu

# Max flattened-spatial lanes processed per in-kernel chunk.  Bounds the
# (27*C, chunk) bf16 patch matrix + (HID, chunk) f32 activations to ~<12 MiB.
_MAX_CHUNK_LANES = 16 * 1024


# ----------------------------------------------------------------------------
# Pallas kernel: fused conv3d(3x3x3)+bias+ReLU -> conv3d(1x1x1)+bias, per (b,d)
# ----------------------------------------------------------------------------
def _dins_fused_kernel(s0_ref, s1_ref, s2_ref, w1_ref, b1_ref, w2_ref, b2_ref,
                       m0_ref, m2_ref, o_ref, *, H, W, TR):
    # s{0,1,2}_ref : (1, 1, C, L) bf16 -- padded depth slices d, d+1, d+2.
    #                L = (H+2)*W + 2: rows 0 / H+1 are zero pad rows, plus one
    #                zero guard element at each end of the flattened plane so
    #                the +/-1 width shifts below stay in bounds.
    # w1_ref       : (HID, 27*C) bf16 -- conv1, matmul-ready; column order is
    #                ((kd*3 + kh)*3 + kw)*C + c.
    # b1_ref       : (HID, 1) f32
    # w2_ref       : (2, HID)  f32 -- 1x1x1 head
    # b2_ref       : (2, 1)    f32
    # m0_ref,m2_ref: (1, H*W)  bf16 -- zero at w==0 / w==W-1 (width-boundary
    #                masks for the -1 / +1 flat shifts, i.e. 'same' pad in W).
    # o_ref        : (1, 1, 2, H*W) f32 -- lane-dense logits for this (b, d).
    slabs = (s0_ref, s1_ref, s2_ref)
    n_chunks = -(-H // TR)
    for ci in range(n_chunks):              # static row-chunk loop (bounds VMEM)
        r0 = ci * TR
        tr = min(TR, H - r0)
        cl = tr * W
        m0 = m0_ref[:, pl.ds(r0 * W, cl)]   # (1, cl)
        m2 = m2_ref[:, pl.ds(r0 * W, cl)]

        # Gather the 27 taps as contiguous lane slices of the flattened plane.
        taps = []
        for kd in range(3):
            slab = slabs[kd]
            for kh in range(3):
                base = 1 + (r0 + kh) * W
                for kw in range(3):
                    tap = slab[0, 0, :, pl.ds(base + kw - 1, cl)]   # (C, cl)
                    if kw == 0:
                        tap = tap * m0      # zero the w==0 column (left pad)
                    elif kw == 2:
                        tap = tap * m2      # zero the w==W-1 column (right pad)
                    taps.append(tap)
        patches = jnp.concatenate(taps, axis=0)                     # (27*C, cl)

        # Single fused-K MXU matmul: (HID, 27*C) @ (27*C, cl), f32 accumulate.
        hid = jnp.dot(w1_ref[...], patches,
                      preferred_element_type=jnp.float32)           # (HID, cl)
        hid = jnp.maximum(hid + b1_ref[...], 0.0)
        logits = jnp.dot(w2_ref[...], hid,
                         preferred_element_type=jnp.float32) + b2_ref[...]
        o_ref[0, 0, :, pl.ds(r0 * W, cl)] = logits.astype(o_ref.dtype)


def _dins_conv(vp, w1m, b1, w2m, b2, m0, m2, *, D, H, W):
    """vp: (B, D+2, C, (H+2)*W + 2) bf16 padded/flattened volume
       -> (B, D, 2, H*W) f32 logits (lane-dense)."""
    B, Dp2, C, L = vp.shape
    HID, K = w1m.shape
    assert Dp2 == D + 2 and L == (H + 2) * W + 2 and K == 27 * C

    TR = max(1, min(H, _MAX_CHUNK_LANES // W))      # rows per in-kernel chunk
    kernel = functools.partial(_dins_fused_kernel, H=H, W=W, TR=TR)

    flops = 2 * B * D * H * W * (27 * C * HID + HID * 2)
    bytes_accessed = (3 * B * D * C * L * 2          # bf16 slab reads (depth halo)
                      + B * D * 2 * H * W * 4        # f32 logits write
                      + HID * K * 2 + (HID + 2 * HID + 2) * 4 + 2 * H * W * 2)
    cost = pl.CostEstimate(flops=flops, transcendentals=0,
                           bytes_accessed=bytes_accessed)

    def slab_spec(off):
        return pl.BlockSpec((1, 1, C, L), lambda b, d, o=off: (b, d + o, 0, 0))

    def const_spec(shape):
        return pl.BlockSpec(shape, lambda b, d: (0,) * len(shape))

    return pl.pallas_call(
        kernel,
        out_shape=jax.ShapeDtypeStruct((B, D, 2, H * W), jnp.float32),
        grid=(B, D),
        in_specs=[
            slab_spec(0), slab_spec(1), slab_spec(2),   # depth slices d, d+1, d+2
            const_spec((HID, K)),                       # conv1 weights (resident)
            const_spec((HID, 1)),                       # conv1 bias
            const_spec((2, HID)),                       # head weights
            const_spec((2, 1)),                         # head bias
            const_spec((1, H * W)),                     # kw=0 width mask
            const_spec((1, H * W)),                     # kw=2 width mask
        ],
        out_specs=pl.BlockSpec((1, 1, 2, H * W), lambda b, d: (b, d, 0, 0)),
        compiler_params=pltpu.CompilerParams(
            dimension_semantics=("parallel", "parallel"),
            vmem_limit_bytes=64 * 1024 * 1024),
        cost_estimate=cost,
    )(vp, vp, vp, w1m, b1, w2m, b2, m0, m2)


# ----------------------------------------------------------------------------
# Synthetic weights (stand-in for the ONNX checkpoint)
# ----------------------------------------------------------------------------
def make_dins_params(c_in, hidden=32, dtype=jnp.float32):
    k1, k2, k3, k4 = jax.random.split(jax.random.PRNGKey(42), 4)
    w1 = 0.05 * jax.random.normal(k1, (3, 3, 3, c_in, hidden), dtype)  # DHWIO
    b1 = 0.01 * jax.random.normal(k2, (hidden,), dtype)
    w2 = 0.05 * jax.random.normal(k3, (hidden, 2), dtype)              # 1x1x1
    b2 = 0.01 * jax.random.normal(k4, (2,), dtype)
    return dict(w1=w1, b1=b1, w2=w2, b2=b2)


# ----------------------------------------------------------------------------
# Mirror of DINsNetwork.forward (plumbing identical, ONNX body substituted)
# ----------------------------------------------------------------------------
@jax.jit
def dins_forward(x, w1, b1, w2, b2):
    """x: (B, C, H, W, D), C = 1 image + guide channels.
       returns (B, 2, H, W, D) float32 logits."""
    B, C, H, W, D = x.shape
    HID = w1.shape[-1]
    # Module plumbing: permute(0,4,2,3,1) makes the volume channels-last; the
    # image/guide split + re-concat is an identity and is elided.  For the
    # kernel we use a lane-friendly layout instead: channels ahead of spatial,
    # the (padded-H x W) plane flattened into the last (lane) dim, with one
    # zero guard element at each end for the +/-1 width shifts.
    # NOTE: activations/conv1 stream as bf16 (f32 accumulate); real ONNX
    # weights with larger dynamic range may want f32 here.
    t = jnp.transpose(x, (0, 4, 1, 2, 3)).astype(jnp.bfloat16)    # (B,D,C,H,W)
    tp = jnp.pad(t, ((0, 0), (1, 1), (0, 0), (1, 1), (0, 0)))     # pad D and H
    vp = jnp.pad(tp.reshape(B, D + 2, C, (H + 2) * W),
                 ((0, 0), (0, 0), (0, 0), (1, 1)))                # flat guards

    # Matmul-ready weights: conv1 -> (HID, 27*C), head -> (2, HID).
    w1m = jnp.transpose(w1.reshape(27 * C, HID)).astype(jnp.bfloat16)
    b1c = b1.reshape(HID, 1).astype(jnp.float32)
    w2m = jnp.transpose(w2).astype(jnp.float32)
    b2c = b2.reshape(2, 1).astype(jnp.float32)

    # Width-boundary masks ('same' zero pad in W) for the shifted taps.
    col = jnp.arange(H * W, dtype=jnp.int32) % W
    m0 = (col != 0).astype(jnp.bfloat16).reshape(1, H * W)
    m2 = (col != W - 1).astype(jnp.bfloat16).reshape(1, H * W)

    out = _dins_conv(vp, w1m, b1c, w2m, b2c, m0, m2, D=D, H=H, W=W)
    out = out.reshape(B, D, 2, H, W)
    # permute(0,4,2,3,1) back and cast to float32, exactly like the module.
    return jnp.transpose(out, (0, 2, 3, 4, 1)).astype(jnp.float32)


# ----------------------------------------------------------------------------
# Independent pure-JAX reference (real conv3d) for correctness checking
# ----------------------------------------------------------------------------
def dins_forward_ref(x, w1, b1, w2, b2):
    t = jnp.transpose(x, (0, 4, 2, 3, 1)).astype(jnp.float32)
    dn = lax.conv_dimension_numbers(t.shape, w1.shape,
                                    ("NDHWC", "DHWIO", "NDHWC"))
    h = lax.conv_general_dilated(
        t, w1.astype(jnp.float32), window_strides=(1, 1, 1), padding="SAME",
        dimension_numbers=dn, precision=lax.Precision.HIGHEST)
    h = jnp.maximum(h + b1, 0.0)
    o = jnp.einsum("bdhwk,km->bdhwm", h, w2.astype(jnp.float32),
                   precision=lax.Precision.HIGHEST) + b2
    return jnp.transpose(o, (0, 4, 2, 3, 1)).astype(jnp.float32)


if __name__ == "__main__":
    # Small shapes: batch=2, channels=3 (1 image + 2 guidance), H=W=D=8.
    B, C, H, W, D = 2, 3, 8, 8, 8
    x = jax.random.normal(jax.random.PRNGKey(0), (B, C, H, W, D), jnp.float32)

    params = make_dins_params(c_in=C, hidden=32)
    out = dins_forward(x, params["w1"], params["b1"],
                       params["w2"], params["b2"])
    out = jax.block_until_ready(out)

    ref = dins_forward_ref(x, params["w1"], params["b1"],
                           params["w2"], params["b2"])
    assert out.shape == (B, 2, H, W, D), out.shape
    assert out.dtype == jnp.float32
    err = float(jnp.max(jnp.abs(out - ref)))
    assert err < 3e-2, f"max abs err {err}"

    print("KERNEL_OK")
</pallas_src>

<mosaic_0001>
module attributes {stable_mosaic.version = 11 : i64} {
  func.func @_dins_fused_kernel(%arg0: i32, %arg1: i32, %arg2: memref<1x1x3x82xbf16, #tpu.memory_space<vmem>>, %arg3: memref<1x1x3x82xbf16, #tpu.memory_space<vmem>>, %arg4: memref<1x1x3x82xbf16, #tpu.memory_space<vmem>>, %arg5: memref<32x81xbf16, #tpu.memory_space<vmem>>, %arg6: memref<32x1xf32, #tpu.memory_space<vmem>>, %arg7: memref<2x32xf32, #tpu.memory_space<vmem>>, %arg8: memref<2x1xf32, #tpu.memory_space<vmem>>, %arg9: memref<1x64xbf16, #tpu.memory_space<vmem>>, %arg10: memref<1x64xbf16, #tpu.memory_space<vmem>>, %arg11: memref<1x1x2x64xf32, #tpu.memory_space<vmem>>) attributes {dimension_semantics = [#tpu.dimension_semantics<parallel>, #tpu.dimension_semantics<parallel>], iteration_bounds = array<i64: 2, 8>, scalar_prefetch = 0 : i64, scratch_operands = 0 : i64, tpu.core_type = #tpu.core_type<tc>, window_params = [{transform_indices = @transform_0, window_bounds = array<i64: 1, 1, 3, 82>}, {transform_indices = @transform_1, window_bounds = array<i64: 1, 1, 3, 82>}, {transform_indices = @transform_2, window_bounds = array<i64: 1, 1, 3, 82>}, {pipeline_mode = #tpu.pipeline_mode<synchronous>, transform_indices = @transform_3, window_bounds = array<i64: 32, 81>}, {pipeline_mode = #tpu.pipeline_mode<synchronous>, transform_indices = @transform_4, window_bounds = array<i64: 32, 1>}, {pipeline_mode = #tpu.pipeline_mode<synchronous>, transform_indices = @transform_5, window_bounds = array<i64: 2, 32>}, {pipeline_mode = #tpu.pipeline_mode<synchronous>, transform_indices = @transform_6, window_bounds = array<i64: 2, 1>}, {pipeline_mode = #tpu.pipeline_mode<synchronous>, transform_indices = @transform_7, window_bounds = array<i64: 1, 64>}, {pipeline_mode = #tpu.pipeline_mode<synchronous>, transform_indices = @transform_8, window_bounds = array<i64: 1, 64>}, {transform_indices = @transform_9, window_bounds = array<i64: 1, 1, 2, 64>}]} {
    %c0 = arith.constant 0 : index
    %c0_0 = arith.constant 0 : index
    %0 = vector.load %arg9[%c0, %c0_0] : memref<1x64xbf16, #tpu.memory_space<vmem>>, vector<1x64xbf16>
    %c0_1 = arith.constant 0 : index
    %c0_2 = arith.constant 0 : index
    %1 = vector.load %arg10[%c0_1, %c0_2] : memref<1x64xbf16, #tpu.memory_space<vmem>>, vector<1x64xbf16>
    %c0_3 = arith.constant 0 : index
    %c0_4 = arith.constant 0 : index
    %c0_5 = arith.constant 0 : index
    %c0_6 = arith.constant 0 : index
    %2 = vector.load %arg2[%c0_3, %c0_4, %c0_5, %c0_6] : memref<1x1x3x82xbf16, #tpu.memory_space<vmem>>, vector<1x1x3x64xbf16>
    %3 = vector.shape_cast %2 : vector<1x1x3x64xbf16> to vector<3x64xbf16>
    %4 = vector.broadcast %0 : vector<1x64xbf16> to vector<3x64xbf16>
    %5 = arith.mulf %3, %4 : vector<3x64xbf16>
    %c0_7 = arith.constant 0 : index
    %c0_8 = arith.constant 0 : index
    %c0_9 = arith.constant 0 : index
    %c1 = arith.constant 1 : index
    %6 = vector.load %arg2[%c0_7, %c0_8, %c0_9, %c1] : memref<1x1x3x82xbf16, #tpu.memory_space<vmem>>, vector<1x1x3x64xbf16>
    %7 = vector.shape_cast %6 : vector<1x1x3x64xbf16> to vector<3x64xbf16>
    %c0_10 = arith.constant 0 : index
    %c0_11 = arith.constant 0 : index
    %c0_12 = arith.constant 0 : index
    %c2 = arith.constant 2 : index
    %8 = vector.load %arg2[%c0_10, %c0_11, %c0_12, %c2] : memref<1x1x3x82xbf16, #tpu.memory_space<vmem>>, vector<1x1x3x64xbf16>
    %9 = vector.shape_cast %8 : vector<1x1x3x64xbf16> to vector<3x64xbf16>
    %10 = vector.broadcast %1 : vector<1x64xbf16> to vector<3x64xbf16>
    %11 = arith.mulf %9, %10 : vector<3x64xbf16>
    %c0_13 = arith.constant 0 : index
    %c0_14 = arith.constant 0 : index
    %c0_15 = arith.constant 0 : index
    %c8 = arith.constant 8 : index
    %12 = vector.load %arg2[%c0_13, %c0_14, %c0_15, %c8] : memref<1x1x3x82xbf16, #tpu.memory_space<vmem>>, vector<1x1x3x64xbf16>
    %13 = vector.shape_cast %12 : vector<1x1x3x64xbf16> to vector<3x64xbf16>
    %14 = vector.broadcast %0 : vector<1x64xbf16> to vector<3x64xbf16>
    %15 = arith.mulf %13, %14 : vector<3x64xbf16>
    %c0_16 = arith.constant 0 : index
    %c0_17 = arith.constant 0 : index
    %c0_18 = arith.constant 0 : index
    %c9 = arith.constant 9 : index
    %16 = vector.load %arg2[%c0_16, %c0_17, %c0_18, %c9] : memref<1x1x3x82xbf16, #tpu.memory_space<vmem>>, vector<1x1x3x64xbf16>
    %17 = vector.shape_cast %16 : vector<1x1x3x64xbf16> to vector<3x64xbf16>
    %c0_19 = arith.constant 0 : index
    %c0_20 = arith.constant 0 : index
    %c0_21 = arith.constant 0 : index
    %c10 = arith.constant 10 : index
    %18 = vector.load %arg2[%c0_19, %c0_20, %c0_21, %c10] : memref<1x1x3x82xbf16, #tpu.memory_space<vmem>>, vector<1x1x3x64xbf16>
    %19 = vector.shape_cast %18 : vector<1x1x3x64xbf16> to vector<3x64xbf16>
    %20 = vector.broadcast %1 : vector<1x64xbf16> to vector<3x64xbf16>
    %21 = arith.mulf %19, %20 : vector<3x64xbf16>
    %c0_22 = arith.constant 0 : index
    %c0_23 = arith.constant 0 : index
    %c0_24 = arith.constant 0 : index
    %c16 = arith.constant 16 : index
    %22 = vector.load %arg2[%c0_22, %c0_23, %c0_24, %c16] : memref<1x1x3x82xbf16, #tpu.memory_space<vmem>>, vector<1x1x3x64xbf16>
    %23 = vector.shape_cast %22 : vector<1x1x3x64xbf16> to vector<3x64xbf16>
    %24 = vector.broadcast %0 : vector<1x64xbf16> to vector<3x64xbf16>
    %25 = arith.mulf %23, %24 : vector<3x64xbf16>
    %c0_25 = arith.constant 0 : index
    %c0_26 = arith.constant 0 : index
    %c0_27 = arith.constant 0 : index
    %c17 = arith.constant 17 : index
    %26 = vector.load %arg2[%c0_25, %c0_26, %c0_27, %c17] : memref<1x1x3x82xbf16, #tpu.memory_space<vmem>>, vector<1x1x3x64xbf16>
    %27 = vector.shape_cast %26 : vector<1x1x3x64xbf16> to vector<3x64xbf16>
    %c0_28 = arith.constant 0 : index
    %c0_29 = arith.constant 0 : index
    %c0_30 = arith.constant 0 : index
    %c18 = arith.constant 18 : index
    %28 = vector.load %arg2[%c0_28, %c0_29, %c0_30, %c18] : memref<1x1x3x82xbf16, #tpu.memory_space<vmem>>, vector<1x1x3x64xbf16>
    %29 = vector.shape_cast %28 : vector<1x1x3x64xbf16> to vector<3x64xbf16>
    %30 = vector.broadcast %1 : vector<1x64xbf16> to vector<3x64xbf16>
    %31 = arith.mulf %29, %30 : vector<3x64xbf16>
    %c0_31 = arith.constant 0 : index
    %c0_32 = arith.constant 0 : index
    %c0_33 = arith.constant 0 : index
    %c0_34 = arith.constant 0 : index
    %32 = vector.load %arg3[%c0_31, %c0_32, %c0_33, %c0_34] : memref<1x1x3x82xbf16, #tpu.memory_space<vmem>>, vector<1x1x3x64xbf16>
    %33 = vector.shape_cast %32 : vector<1x1x3x64xbf16> to vector<3x64xbf16>
    %34 = vector.broadcast %0 : vector<1x64xbf16> to vector<3x64xbf16>
    %35 = arith.mulf %33, %34 : vector<3x64xbf16>
    %c0_35 = arith.constant 0 : index
    %c0_36 = arith.constant 0 : index
    %c0_37 = arith.constant 0 : index
    %c1_38 = arith.constant 1 : index
    %36 = vector.load %arg3[%c0_35, %c0_36, %c0_37, %c1_38] : memref<1x1x3x82xbf16, #tpu.memory_space<vmem>>, vector<1x1x3x64xbf16>
    %37 = vector.shape_cast %36 : vector<1x1x3x64xbf16> to vector<3x64xbf16>
    %c0_39 = arith.constant 0 : index
    %c0_40 = arith.constant 0 : index
    %c0_41 = arith.constant 0 : index
    %c2_42 = arith.constant 2 : index
    %38 = vector.load %arg3[%c0_39, %c0_40, %c0_41, %c2_42] : memref<1x1x3x82xbf16, #tpu.memory_space<vmem>>, vector<1x1x3x64xbf16>
    %39 = vector.shape_cast %38 : vector<1x1x3x64xbf16> to vector<3x64xbf16>
    %40 = vector.broadcast %1 : vector<1x64xbf16> to vector<3x64xbf16>
    %41 = arith.mulf %39, %40 : vector<3x64xbf16>
    %c0_43 = arith.constant 0 : index
    %c0_44 = arith.constant 0 : index
    %c0_45 = arith.constant 0 : index
    %c8_46 = arith.constant 8 : index
    %42 = vector.load %arg3[%c0_43, %c0_44, %c0_45, %c8_46] : memref<1x1x3x82xbf16, #tpu.memory_space<vmem>>, vector<1x1x3x64xbf16>
    %43 = vector.shape_cast %42 : vector<1x1x3x64xbf16> to vector<3x64xbf16>
    %44 = vector.broadcast %0 : vector<1x64xbf16> to vector<3x64xbf16>
    %45 = arith.mulf %43, %44 : vector<3x64xbf16>
    %c0_47 = arith.constant 0 : index
    %c0_48 = arith.constant 0 : index
    %c0_49 = arith.constant 0 : index
    %c9_50 = arith.constant 9 : index
    %46 = vector.load %arg3[%c0_47, %c0_48, %c0_49, %c9_50] : memref<1x1x3x82xbf16, #tpu.memory_space<vmem>>, vector<1x1x3x64xbf16>
    %47 = vector.shape_cast %46 : vector<1x1x3x64xbf16> to vector<3x64xbf16>
    %c0_51 = arith.constant 0 : index
    %c0_52 = arith.constant 0 : index
    %c0_53 = arith.constant 0 : index
    %c10_54 = arith.constant 10 : index
    %48 = vector.load %arg3[%c0_51, %c0_52, %c0_53, %c10_54] : memref<1x1x3x82xbf16, #tpu.memory_space<vmem>>, vector<1x1x3x64xbf16>
    %49 = vector.shape_cast %48 : vector<1x1x3x64xbf16> to vector<3x64xbf16>
    %50 = vector.broadcast %1 : vector<1x64xbf16> to vector<3x64xbf16>
    %51 = arith.mulf %49, %50 : vector<3x64xbf16>
    %c0_55 = arith.constant 0 : index
    %c0_56 = arith.constant 0 : index
    %c0_57 = arith.constant 0 : index
    %c16_58 = arith.constant 16 : index
    %52 = vector.load %arg3[%c0_55, %c0_56, %c0_57, %c16_58] : memref<1x1x3x82xbf16, #tpu.memory_space<vmem>>, vector<1x1x3x64xbf16>
    %53 = vector.shape_cast %52 : vector<1x1x3x64xbf16> to vector<3x64xbf16>
    %54 = vector.broadcast %0 : vector<1x64xbf16> to vector<3x64xbf16>
    %55 = arith.mulf %53, %54 : vector<3x64xbf16>
    %c0_59 = arith.constant 0 : index
    %c0_60 = arith.constant 0 : index
    %c0_61 = arith.constant 0 : index
    %c17_62 = arith.constant 17 : index
    %56 = vector.load %arg3[%c0_59, %c0_60, %c0_61, %c17_62] : memref<1x1x3x82xbf16, #tpu.memory_space<vmem>>, vector<1x1x3x64xbf16>
    %57 = vector.shape_cast %56 : vector<1x1x3x64xbf16> to vector<3x64xbf16>
    %c0_63 = arith.constant 0 : index
    %c0_64 = arith.constant 0 : index
    %c0_65 = arith.constant 0 : index
    %c18_66 = arith.constant 18 : index
    %58 = vector.load %arg3[%c0_63, %c0_64, %c0_65, %c18_66] : memref<1x1x3x82xbf16, #tpu.memory_space<vmem>>, vector<1x1x3x64xbf16>
    %59 = vector.shape_cast %58 : vector<1x1x3x64xbf16> to vector<3x64xbf16>
    %60 = vector.broadcast %1 : vector<1x64xbf16> to vector<3x64xbf16>
    %61 = arith.mulf %59, %60 : vector<3x64xbf16>
    %c0_67 = arith.constant 0 : index
    %c0_68 = arith.constant 0 : index
    %c0_69 = arith.constant 0 : index
    %c0_70 = arith.constant 0 : index
    %62 = vector.load %arg4[%c0_67, %c0_68, %c0_69, %c0_70] : memref<1x1x3x82xbf16, #tpu.memory_space<vmem>>, vector<1x1x3x64xbf16>
    %63 = vector.shape_cast %62 : vector<1x1x3x64xbf16> to vector<3x64xbf16>
    %64 = vector.broadcast %0 : vector<1x64xbf16> to vector<3x64xbf16>
    %65 = arith.mulf %63, %64 : vector<3x64xbf16>
    %c0_71 = arith.constant 0 : index
    %c0_72 = arith.constant 0 : index
    %c0_73 = arith.constant 0 : index
    %c1_74 = arith.constant 1 : index
    %66 = vector.load %arg4[%c0_71, %c0_72, %c0_73, %c1_74] : memref<1x1x3x82xbf16, #tpu.memory_space<vmem>>, vector<1x1x3x64xbf16>
    %67 = vector.shape_cast %66 : vector<1x1x3x64xbf16> to vector<3x64xbf16>
    %c0_75 = arith.constant 0 : index
    %c0_76 = arith.constant 0 : index
    %c0_77 = arith.constant 0 : index
    %c2_78 = arith.constant 2 : index
    %68 = vector.load %arg4[%c0_75, %c0_76, %c0_77, %c2_78] : memref<1x1x3x82xbf16, #tpu.memory_space<vmem>>, vector<1x1x3x64xbf16>
    %69 = vector.shape_cast %68 : vector<1x1x3x64xbf16> to vector<3x64xbf16>
    %70 = vector.broadcast %1 : vector<1x64xbf16> to vector<3x64xbf16>
    %71 = arith.mulf %69, %70 : vector<3x64xbf16>
    %c0_79 = arith.constant 0 : index
    %c0_80 = arith.constant 0 : index
    %c0_81 = arith.constant 0 : index
    %c8_82 = arith.constant 8 : index
    %72 = vector.load %arg4[%c0_79, %c0_80, %c0_81, %c8_82] : memref<1x1x3x82xbf16, #tpu.memory_space<vmem>>, vector<1x1x3x64xbf16>
    %73 = vector.shape_cast %72 : vector<1x1x3x64xbf16> to vector<3x64xbf16>
    %74 = vector.broadcast %0 : vector<1x64xbf16> to vector<3x64xbf16>
    %75 = arith.mulf %73, %74 : vector<3x64xbf16>
    %c0_83 = arith.constant 0 : index
    %c0_84 = arith.constant 0 : index
    %c0_85 = arith.constant 0 : index
    %c9_86 = arith.constant 9 : index
    %76 = vector.load %arg4[%c0_83, %c0_84, %c0_85, %c9_86] : memref<1x1x3x82xbf16, #tpu.memory_space<vmem>>, vector<1x1x3x64xbf16>
    %77 = vector.shape_cast %76 : vector<1x1x3x64xbf16> to vector<3x64xbf16>
    %c0_87 = arith.constant 0 : index
    %c0_88 = arith.constant 0 : index
    %c0_89 = arith.constant 0 : index
    %c10_90 = arith.constant 10 : index
    %78 = vector.load %arg4[%c0_87, %c0_88, %c0_89, %c10_90] : memref<1x1x3x82xbf16, #tpu.memory_space<vmem>>, vector<1x1x3x64xbf16>
    %79 = vector.shape_cast %78 : vector<1x1x3x64xbf16> to vector<3x64xbf16>
    %80 = vector.broadcast %1 : vector<1x64xbf16> to vector<3x64xbf16>
    %81 = arith.mulf %79, %80 : vector<3x64xbf16>
    %c0_91 = arith.constant 0 : index
    %c0_92 = arith.constant 0 : index
    %c0_93 = arith.constant 0 : index
    %c16_94 = arith.constant 16 : index
    %82 = vector.load %arg4[%c0_91, %c0_92, %c0_93, %c16_94] : memref<1x1x3x82xbf16, #tpu.memory_space<vmem>>, vector<1x1x3x64xbf16>
    %83 = vector.shape_cast %82 : vector<1x1x3x64xbf16> to vector<3x64xbf16>
    %84 = vector.broadcast %0 : vector<1x64xbf16> to vector<3x64xbf16>
    %85 = arith.mulf %83, %84 : vector<3x64xbf16>
    %c0_95 = arith.constant 0 : index
    %c0_96 = arith.constant 0 : index
    %c0_97 = arith.constant 0 : index
    %c17_98 = arith.constant 17 : index
    %86 = vector.load %arg4[%c0_95, %c0_96, %c0_97, %c17_98] : memref<1x1x3x82xbf16, #tpu.memory_space<vmem>>, vector<1x1x3x64xbf16>
    %87 = vector.shape_cast %86 : vector<1x1x3x64xbf16> to vector<3x64xbf16>
    %c0_99 = arith.constant 0 : index
    %c0_100 = arith.constant 0 : index
    %c0_101 = arith.constant 0 : index
    %c18_102 = arith.constant 18 : index
    %88 = vector.load %arg4[%c0_99, %c0_100, %c0_101, %c18_102] : memref<1x1x3x82xbf16, #tpu.memory_space<vmem>>, vector<1x1x3x64xbf16>
    %89 = vector.shape_cast %88 : vector<1x1x3x64xbf16> to vector<3x64xbf16>
    %90 = vector.broadcast %1 : vector<1x64xbf16> to vector<3x64xbf16>
    %91 = arith.mulf %89, %90 : vector<3x64xbf16>
    %92 = tpu.concatenate %5, %7, %11, %15, %17, %21, %25, %27, %31, %35, %37, %41, %45, %47, %51, %55 in 0 : vector<3x64xbf16>, vector<3x64xbf16>, vector<3x64xbf16>, vector<3x64xbf16>, vector<3x64xbf16>, vector<3x64xbf16>, vector<3x64xbf16>, vector<3x64xbf16>, vector<3x64xbf16>, vector<3x64xbf16>, vector<3x64xbf16>, vector<3x64xbf16>, vector<3x64xbf16>, vector<3x64xbf16>, vector<3x64xbf16>, vector<3x64xbf16> -> vector<48x64xbf16>
    %93 = tpu.concatenate %57, %61, %65, %67, %71, %75, %77, %81, %85, %87, %91 in 0 : vector<3x64xbf16>, vector<3x64xbf16>, vector<3x64xbf16>, vector<3x64xbf16>, vector<3x64xbf16>, vector<3x64xbf16>, vector<3x64xbf16>, vector<3x64xbf16>, vector<3x64xbf16>, vector<3x64xbf16>, vector<3x64xbf16> -> vector<33x64xbf16>
    %94 = tpu.concatenate %92, %93 in 0 : vector<48x64xbf16>, vector<33x64xbf16> -> vector<81x64xbf16>
    %c0_103 = arith.constant 0 : index
    %c0_104 = arith.constant 0 : index
    %95 = vector.load %arg5[%c0_103, %c0_104] : memref<32x81xbf16, #tpu.memory_space<vmem>>, vector<32x81xbf16>
    %cst = arith.constant dense<0.000000e+00> : vector<32x64xf32>
    %96 = tpu.matmul %95, %94, %cst {dimension_numbers = #tpu.dot_dimension_numbers<[1], [0], [0], [1], [0, 0, 1, 1], [], []>} : vector<32x81xbf16>, vector<81x64xbf16>, vector<32x64xf32> -> vector<32x64xf32>
    %c0_105 = arith.constant 0 : index
    %c0_106 = arith.constant 0 : index
    %97 = vector.load %arg6[%c0_105, %c0_106] : memref<32x1xf32, #tpu.memory_space<vmem>>, vector<32x1xf32>
    %98 = vector.broadcast %97 : vector<32x1xf32> to vector<32x64xf32>
    %99 = arith.addf %96, %98 : vector<32x64xf32>
    %cst_107 = arith.constant 0.000000e+00 : f32
    %100 = vector.broadcast %cst_107 : f32 to vector<32x64xf32>
    %101 = arith.maximumf %99, %100 : vector<32x64xf32>
    %c0_108 = arith.constant 0 : index
    %c0_109 = arith.constant 0 : index
    %102 = vector.load %arg7[%c0_108, %c0_109] : memref<2x32xf32, #tpu.memory_space<vmem>>, vector<2x32xf32>
    %cst_110 = arith.constant dense<0.000000e+00> : vector<2x64xf32>
    %103 = tpu.matmul %102, %101, %cst_110 {dimension_numbers = #tpu.dot_dimension_numbers<[1], [0], [0], [1], [0, 0, 1, 1], [], []>} : vector<2x32xf32>, vector<32x64xf32>, vector<2x64xf32> -> vector<2x64xf32>
    %c0_111 = arith.constant 0 : index
    %c0_112 = arith.constant 0 : index
    %104 = vector.load %arg8[%c0_111, %c0_112] : memref<2x1xf32, #tpu.memory_space<vmem>>, vector<2x1xf32>
    %105 = vector.broadcast %104 : vector<2x1xf32> to vector<2x64xf32>
    %106 = arith.addf %103, %105 : vector<2x64xf32>
    %c0_113 = arith.constant 0 : index
    %c0_114 = arith.constant 0 : index
    %c0_115 = arith.constant 0 : index
    %c0_116 = arith.constant 0 : index
    %107 = vector.load %arg11[%c0_113, %c0_114, %c0_115, %c0_116] : memref<1x1x2x64xf32, #tpu.memory_space<vmem>>, vector<1x1x2x64xf32>
    %108 = vector.shape_cast %107 : vector<1x1x2x64xf32> to vector<2x64xf32>
    %109 = vector.shape_cast %106 : vector<2x64xf32> to vector<1x1x2x64xf32>
    tpu.vector_store %arg11[%c0_113, %c0_114, %c0_115, %c0_116], %109 {strides = array<i32>} : memref<1x1x2x64xf32, #tpu.memory_space<vmem>>, vector<1x1x2x64xf32>,
    return
  }
  func.func @transform_0(%arg0: i32, %arg1: i32) -> (i32, i32, i32, i32) {
    %c0_i32 = arith.constant 0 : i32
    %0 = arith.addi %arg1, %c0_i32 : i32
    %c0_i32_0 = arith.constant 0 : i32
    %c0_i32_1 = arith.constant 0 : i32
    %c0_i32_2 = arith.constant 0 : i32
    return %arg0, %0, %c0_i32_0, %c0_i32_1 : i32, i32, i32, i32
  }
  func.func @transform_1(%arg0: i32, %arg1: i32) -> (i32, i32, i32, i32) {
    %c1_i32 = arith.constant 1 : i32
    %0 = arith.addi %arg1, %c1_i32 : i32
    %c0_i32 = arith.constant 0 : i32
    %c0_i32_0 = arith.constant 0 : i32
    %c0_i32_1 = arith.constant 0 : i32
    return %arg0, %0, %c0_i32, %c0_i32_0 : i32, i32, i32, i32
  }
  func.func @transform_2(%arg0: i32, %arg1: i32) -> (i32, i32, i32, i32) {
    %c2_i32 = arith.constant 2 : i32
    %0 = arith.addi %arg1, %c2_i32 : i32
    %c0_i32 = arith.constant 0 : i32
    %c0_i32_0 = arith.constant 0 : i32
    %c0_i32_1 = arith.constant 0 : i32
    return %arg0, %0, %c0_i32, %c0_i32_0 : i32, i32, i32, i32
  }
  func.func @transform_3(%arg0: i32, %arg1: i32) -> (i32, i32) {
    %c0_i32 = arith.constant 0 : i32
    %c0_i32_0 = arith.constant 0 : i32
    %c0_i32_1 = arith.constant 0 : i32
    return %c0_i32, %c0_i32_0 : i32, i32
  }
  func.func @transform_4(%arg0: i32, %arg1: i32) -> (i32, i32) {
    %c0_i32 = arith.constant 0 : i32
    %c0_i32_0 = arith.constant 0 : i32
    %c0_i32_1 = arith.constant 0 : i32
    return %c0_i32, %c0_i32_0 : i32, i32
  }
  func.func @transform_5(%arg0: i32, %arg1: i32) -> (i32, i32) {
    %c0_i32 = arith.constant 0 : i32
    %c0_i32_0 = arith.constant 0 : i32
    %c0_i32_1 = arith.constant 0 : i32
    return %c0_i32, %c0_i32_0 : i32, i32
  }
  func.func @transform_6(%arg0: i32, %arg1: i32) -> (i32, i32) {
    %c0_i32 = arith.constant 0 : i32
    %c0_i32_0 = arith.constant 0 : i32
    %c0_i32_1 = arith.constant 0 : i32
    return %c0_i32, %c0_i32_0 : i32, i32
  }
  func.func @transform_7(%arg0: i32, %arg1: i32) -> (i32, i32) {
    %c0_i32 = arith.constant 0 : i32
    %c0_i32_0 = arith.constant 0 : i32
    %c0_i32_1 = arith.constant 0 : i32
    return %c0_i32, %c0_i32_0 : i32, i32
  }
  func.func @transform_8(%arg0: i32, %arg1: i32) -> (i32, i32) {
    %c0_i32 = arith.constant 0 : i32
    %c0_i32_0 = arith.constant 0 : i32
    %c0_i32_1 = arith.constant 0 : i32
    return %c0_i32, %c0_i32_0 : i32, i32
  }
  func.func @transform_9(%arg0: i32, %arg1: i32) -> (i32, i32, i32, i32) {
    %c0_i32 = arith.constant 0 : i32
    %c0_i32_0 = arith.constant 0 : i32
    %c0_i32_1 = arith.constant 0 : i32
    return %arg0, %arg1, %c0_i32, %c0_i32_0 : i32, i32, i32, i32
  }
}

</mosaic_0001>

<llo_original>
// kernel: dins_forward.1
$region0: #{dins_forward.1}
  #allocation0 [shape = 'u32[]', space=smem, size = 0x4, offset = 0x4, fixed_abs, tag = 'smem constant byte address 0x4 - core index']
  #allocation1 [shape = 'u32[144,128]{1,0:T(1,128)}', space=vmem, size = 0x12000, scoped, tag = 'internal scratch']
  %s0 = inlined_call_operand.hbm [shape: bf16[2,10,3,82], index: 0, kind: input, shape index: {}, may-alias: {0,1,2}]
  %s1 = inlined_call_operand.hbm [shape: bf16[2,10,3,82], index: 1, kind: input, shape index: {}, may-alias: {0,1,2}]
  %s2 = inlined_call_operand.hbm [shape: bf16[2,10,3,82], index: 2, kind: input, shape index: {}, may-alias: {0,1,2}]
  %s3 = inlined_call_operand.hbm [shape: bf16[32,81], index: 3, kind: input, shape index: {}]
  %s4 = inlined_call_operand.hbm [shape: f32[32,1], index: 4, kind: input, shape index: {}]
  %s5 = inlined_call_operand.hbm [shape: f32[2,32], index: 5, kind: input, shape index: {}]
  %s6 = inlined_call_operand.hbm [shape: f32[2,1], index: 6, kind: input, shape index: {}]
  %s7 = inlined_call_operand.hbm [shape: bf16[1,64], index: 7, kind: input, shape index: {}]
  %s8 = inlined_call_operand.hbm [shape: bf16[1,64], index: 8, kind: input, shape index: {}]
  %s9 = inlined_call_operand.hbm [shape: f32[2,8,2,64], index: 9, kind: output, shape index: {}]
  %s10 = sld [smem:[#allocation0]]
  $region105: #{dins_forward.1} parent=0
    _
  %s12 = ssub.s32 1, %s10
  %s13 = scalar_select 0, %s12, %s10
  $region1: #{dins_forward.1} parent=0
    #allocation2 [shape = 'u8[2048]{0}', space=vmem, size = 0x800, scoped, tag = 'input window, operand 0']
    #allocation3 [shape = 's32[2]{0}', space=sflag, size = 0x8, scoped, tag = 'scoped memory for dins_forward.1']
    #allocation4 [shape = 's32[2]{0}', space=sflag, size = 0x8, scoped, tag = 'scoped memory for dins_forward.1']
    #allocation5 [shape = 'u8[2048]{0}', space=vmem, size = 0x800, scoped, tag = 'input window, operand 1']
    #allocation6 [shape = 's32[2]{0}', space=sflag, size = 0x8, scoped, tag = 'scoped memory for dins_forward.1']
    #allocation7 [shape = 'u8[2048]{0}', space=vmem, size = 0x800, scoped, tag = 'input window, operand 2']
    #allocation8 [shape = 'u8[8192]{0}', space=vmem, size = 0x2000, scoped, tag = 'input window, operand 3, single buffered']
    #allocation9 [shape = 's32[1]{0}', space=sflag, size = 0x4, scoped, tag = 'scoped memory for dins_forward.1']
    #allocation10 [shape = 'u8[16384]{0}', space=vmem, size = 0x4000, scoped, tag = 'input window, operand 4, single buffered']
    #allocation11 [shape = 'u8[1024]{0}', space=vmem, size = 0x400, scoped, tag = 'input window, operand 5, single buffered']
    #allocation12 [shape = 's32[1]{0}', space=sflag, size = 0x4, scoped, tag = 'scoped memory for dins_forward.1']
    #allocation13 [shape = 'u8[1024]{0}', space=vmem, size = 0x400, scoped, tag = 'input window, operand 6, single buffered']
    #allocation14 [shape = 'u8[512]{0}', space=vmem, size = 0x400, scoped, tag = 'input window, operand 7, single buffered']
    #allocation15 [shape = 's32[1]{0}', space=sflag, size = 0x4, scoped, tag = 'scoped memory for dins_forward.1']
    #allocation16 [shape = 'u8[512]{0}', space=vmem, size = 0x400, scoped, tag = 'input window, operand 8, single buffered']
    #allocation17 [shape = 'u8[2048]{0}', space=vmem, size = 0x800, scoped, tag = 'output window, operand 0']
    %14 = vsyncpa [#allocation3], 0
    %s15 = scalar_lea.sflag [#allocation3], 1
    %16 = vsyncpa %s15, 0
    %17 = vsyncpa [#allocation6], 0
    %s18 = scalar_lea.sflag [#allocation6], 1
    %19 = vsyncpa %s18, 0
    %20 = vsyncpa [#allocation9], 0
    %21 = vsyncpa [#allocation12], 0
    %22 = vsyncpa [#allocation15], 0
    %23 = vsyncpa [#allocation4], 0
    %s24 = scalar_lea.sflag [#allocation4], 1
    %25 = vsyncpa %s24, 0
    loop: start=0, step=1, limit=18
    $region2: #{dins_forward.1} parent=1 // loop_pre_header
      _
    $region3: #{dins_forward.1} parent=1 // loop_header
      %s27 = sphi 0, %s31
      %p28 = scmp.ge.s32.totalorder %s27, 18
      %s34 = sphi 0, %s46
      %s35 = sphi 0, %s42
      %s36 = sphi 0, %s34
      %s37 = sphi 0, %s35
      %s38 = sphi 0, %s36
      %s39 = sphi 0, %s37
      %s51 = sphi 0, %s53
      %s54 = sphi 0, %s51
      %s55 = sphi 0, %s54
      %s71 = sphi 0, %s55
      %s81 = sphi 0, %s83
      %s84 = sphi 0, %s81
      %s85 = sphi 0, %s84
      %s101 = sphi 0, %s85
      %s111 = sphi 0, %s113
      %s114 = sphi 0, %s111
      %s115 = sphi 0, %s114
      %s131 = sphi 0, %s115
      %s135 = sphi 0, %s135
      %s137 = sphi 0, %s135
      %s138 = sphi 0, %s137
      %s152 = sphi 0, %s138
      %s156 = sphi 0, %s156
      %s158 = sphi 0, %s156
      %s159 = sphi 0, %s158
      %s173 = sphi 0, %s159
      %s177 = sphi 0, %s177
      %s179 = sphi 0, %s177
      %s180 = sphi 0, %s179
      %s194 = sphi 0, %s180
      %s198 = sphi 0, %s198
      %s200 = sphi 0, %s198
      %s201 = sphi 0, %s200
      %s215 = sphi 0, %s201
      %s219 = sphi 0, %s219
      %s221 = sphi 0, %s219
      %s222 = sphi 0, %s221
      %s236 = sphi 0, %s222
      %s240 = sphi 0, %s240
      %s242 = sphi 0, %s240
      %s243 = sphi 0, %s242
      %s257 = sphi 0, %s243
      %s265 = sphi 0, %s267
      %s268 = sphi 0, %s265
      %s269 = sphi 0, %s268
      %s285 = sphi 0, %s269
    $region4: #{dins_forward.1} parent=1 // loop_header_branch
      %30 = sbr.rel (%p28) target = $region8
    $region5: #{dins_forward.1} parent=1 // loop_body
      %s32 = ssub.s32 %s27, 1
      %s33 = ssub.s32 %s27, 2
      %s40 = sadd.s32 1, %s35
      %p41 = scmp.ge.s32.totalorder %s40, 8
      %s42 = scalar_select %p41, 0, %s40
      %s43 = sadd.s32 1, %s34
      %s44 = scalar_select %p41, %s43, %s34
      %p45 = scmp.ge.s32.totalorder %s44, 2
      %s46 = scalar_select %p45, 0, %s44
      %s47 = ssub.s32 %s34, %s46
      %s48 = ssub.s32 %s35, %s42
      %s49 = sor.u32 %s47, %s48
      %p50 = scmp.eq.s32.totalorder %s49, 0
      %s52 = sadd.s32 %s51, 1
      %s53 = scalar_select %p50, %s51, %s52
      %p56 = pneg %p50
      %p57 = scmp.eq.s32.totalorder %s27, 15
      %p58 = por %p56, %p57
      %p59 = scmp.ne.s32.totalorder %s51, %s54
      %p60 = scmp.eq.s32.totalorder %s27, 0
      %p61 = por %p59, %p60
      %p62 = scmp.ne.s32.totalorder %s51, %s54
      %p63 = scmp.eq.s32.totalorder %s32, 15
      %p64 = por %p62, %p63
      %p65 = scmp.ne.s32.totalorder %s54, %s55
      %p66 = scmp.eq.s32.totalorder %s32, 0
      %p67 = por %p65, %p66
      %p68 = scmp.ne.s32.totalorder %s54, %s55
      %p69 = scmp.eq.s32.totalorder %s33, 15
      %p70 = por %p68, %p69
      %p72 = scmp.ne.s32.totalorder %s55, %s71
      %p73 = scmp.eq.s32.totalorder %s33, 0
      %p74 = por %p72, %p73
      %s75 = sadd.s32 %s35, 1
      %s76 = sadd.s32 %s42, 1
      %s77 = ssub.s32 %s34, %s46
      %s78 = ssub.s32 %s75, %s76
      %s79 = sor.u32 %s77, %s78
      %p80 = scmp.eq.s32.totalorder %s79, 0
      %s82 = sadd.s32 %s81, 1
      %s83 = scalar_select %p80, %s81, %s82
      %p86 = pneg %p80
      %p87 = scmp.eq.s32.totalorder %s27, 15
      %p88 = por %p86, %p87
      %p89 = scmp.ne.s32.totalorder %s81, %s84
      %p90 = scmp.eq.s32.totalorder %s27, 0
      %p91 = por %p89, %p90
      %p92 = scmp.ne.s32.totalorder %s81, %s84
      %p93 = scmp.eq.s32.totalorder %s32, 15
      %p94 = por %p92, %p93
      %p95 = scmp.ne.s32.totalorder %s84, %s85
      %p96 = scmp.eq.s32.totalorder %s32, 0
      %p97 = por %p95, %p96
      %p98 = scmp.ne.s32.totalorder %s84, %s85
      %p99 = scmp.eq.s32.totalorder %s33, 15
      %p100 = por %p98, %p99
      %p102 = scmp.ne.s32.totalorder %s85, %s101
      %p103 = scmp.eq.s32.totalorder %s33, 0
      %p104 = por %p102, %p103
      %s105 = sadd.s32 %s35, 2
      %s106 = sadd.s32 %s42, 2
      %s107 = ssub.s32 %s34, %s46
      %s108 = ssub.s32 %s105, %s106
      %s109 = sor.u32 %s107, %s108
      %p110 = scmp.eq.s32.totalorder %s109, 0
      %s112 = sadd.s32 %s111, 1
      %s113 = scalar_select %p110, %s111, %s112
      %p116 = pneg %p110
      %p117 = scmp.eq.s32.totalorder %s27, 15
      %p118 = por %p116, %p117
      %p119 = scmp.ne.s32.totalorder %s111, %s114
      %p120 = scmp.eq.s32.totalorder %s27, 0
      %p121 = por %p119, %p120
      %p122 = scmp.ne.s32.totalorder %s111, %s114
      %p123 = scmp.eq.s32.totalorder %s32, 15
      %p124 = por %p122, %p123
      %p125 = scmp.ne.s32.totalorder %s114, %s115
      %p126 = scmp.eq.s32.totalorder %s32, 0
      %p127 = por %p125, %p126
      %p128 = scmp.ne.s32.totalorder %s114, %s115
      %p129 = scmp.eq.s32.totalorder %s33, 15
      %p130 = por %p128, %p129
      %p132 = scmp.ne.s32.totalorder %s115, %s131
      %p133 = scmp.eq.s32.totalorder %s33, 0
      %p134 = por %p132, %p133
      %s136 = sadd.s32 %s135, 1
      %p139 = scmp.eq.s32.totalorder %s27, 15
      %p140 = scmp.ne.s32.totalorder %s135, %s137
      %p141 = scmp.eq.s32.totalorder %s27, 0
      %p142 = por %p140, %p141
      %p143 = scmp.ne.s32.totalorder %s135, %s137
      %p144 = scmp.eq.s32.totalorder %s32, 15
      %p145 = por %p143, %p144
      %p146 = scmp.ne.s32.totalorder %s137, %s138
      %p147 = scmp.eq.s32.totalorder %s32, 0
      %p148 = por %p146, %p147
      %p149 = scmp.ne.s32.totalorder %s137, %s138
      %p150 = scmp.eq.s32.totalorder %s33, 15
      %p151 = por %p149, %p150
      %p153 = scmp.ne.s32.totalorder %s138, %s152
      %p154 = scmp.eq.s32.totalorder %s33, 0
      %p155 = por %p153, %p154
      %s157 = sadd.s32 %s156, 1
      %p160 = scmp.eq.s32.totalorder %s27, 15
      %p161 = scmp.ne.s32.totalorder %s156, %s158
      %p162 = scmp.eq.s32.totalorder %s27, 0
      %p163 = por %p161, %p162
      %p164 = scmp.ne.s32.totalorder %s156, %s158
      %p165 = scmp.eq.s32.totalorder %s32, 15
      %p166 = por %p164, %p165
      %p167 = scmp.ne.s32.totalorder %s158, %s159
      %p168 = scmp.eq.s32.totalorder %s32, 0
      %p169 = por %p167, %p168
      %p170 = scmp.ne.s32.totalorder %s158, %s159
      %p171 = scmp.eq.s32.totalorder %s33, 15
      %p172 = por %p170, %p171
      %p174 = scmp.ne.s32.totalorder %s159, %s173
      %p175 = scmp.eq.s32.totalorder %s33, 0
      %p176 = por %p174, %p175
      %s178 = sadd.s32 %s177, 1
      %p181 = scmp.eq.s32.totalorder %s27, 15
      %p182 = scmp.ne.s32.totalorder %s177, %s179
      %p183 = scmp.eq.s32.totalorder %s27, 0
      %p184 = por %p182, %p183
      %p185 = scmp.ne.s32.totalorder %s177, %s179
      %p186 = scmp.eq.s32.totalorder %s32, 15
      %p187 = por %p185, %p186
      %p188 = scmp.ne.s32.totalorder %s179, %s180
      %p189 = scmp.eq.s32.totalorder %s32, 0
      %p190 = por %p188, %p189
      %p191 = scmp.ne.s32.totalorder %s179, %s180
      %p192 = scmp.eq.s32.totalorder %s33, 15
      %p193 = por %p191, %p192
      %p195 = scmp.ne.s32.totalorder %s180, %s194
      %p196 = scmp.eq.s32.totalorder %s33, 0
      %p197 = por %p195, %p196
      %s199 = sadd.s32 %s198, 1
      %p202 = scmp.eq.s32.totalorder %s27, 15
      %p203 = scmp.ne.s32.totalorder %s198, %s200
      %p204 = scmp.eq.s32.totalorder %s27, 0
      %p205 = por %p203, %p204
      %p206 = scmp.ne.s32.totalorder %s198, %s200
      %p207 = scmp.eq.s32.totalorder %s32, 15
      %p208 = por %p206, %p207
      %p209 = scmp.ne.s32.totalorder %s200, %s201
      %p210 = scmp.eq.s32.totalorder %s32, 0
      %p211 = por %p209, %p210
      %p212 = scmp.ne.s32.totalorder %s200, %s201
      %p213 = scmp.eq.s32.totalorder %s33, 15
      %p214 = por %p212, %p213
      %p216 = scmp.ne.s32.totalorder %s201, %s215
      %p217 = scmp.eq.s32.totalorder %s33, 0
      %p218 = por %p216, %p217
      %s220 = sadd.s32 %s219, 1
      %p223 = scmp.eq.s32.totalorder %s27, 15
      %p224 = scmp.ne.s32.totalorder %s219, %s221
      %p225 = scmp.eq.s32.totalorder %s27, 0
      %p226 = por %p224, %p225
      %p227 = scmp.ne.s32.totalorder %s219, %s221
      %p228 = scmp.eq.s32.totalorder %s32, 15
      %p229 = por %p227, %p228
      %p230 = scmp.ne.s32.totalorder %s221, %s222
      %p231 = scmp.eq.s32.totalorder %s32, 0
      %p232 = por %p230, %p231
      %p233 = scmp.ne.s32.totalorder %s221, %s222
      %p234 = scmp.eq.s32.totalorder %s33, 15
      %p235 = por %p233, %p234
      %p237 = scmp.ne.s32.totalorder %s222, %s236
      %p238 = scmp.eq.s32.totalorder %s33, 0
      %p239 = por %p237, %p238
      %s241 = sadd.s32 %s240, 1
      %p244 = scmp.eq.s32.totalorder %s27, 15
      %p245 = scmp.ne.s32.totalorder %s240, %s242
      %p246 = scmp.eq.s32.totalorder %s27, 0
      %p247 = por %p245, %p246
      %p248 = scmp.ne.s32.totalorder %s240, %s242
      %p249 = scmp.eq.s32.totalorder %s32, 15
      %p250 = por %p248, %p249
      %p251 = scmp.ne.s32.totalorder %s242, %s243
      %p252 = scmp.eq.s32.totalorder %s32, 0
      %p253 = por %p251, %p252
      %p254 = scmp.ne.s32.totalorder %s242, %s243
      %p255 = scmp.eq.s32.totalorder %s33, 15
      %p256 = por %p254, %p255
      %p258 = scmp.ne.s32.totalorder %s243, %s257
      %p259 = scmp.eq.s32.totalorder %s33, 0
      %p260 = por %p258, %p259
      %s261 = ssub.s32 %s34, %s46
      %s262 = ssub.s32 %s35, %s42
      %s263 = sor.u32 %s261, %s262
      %p264 = scmp.eq.s32.totalorder %s263, 0
      %s266 = sadd.s32 %s265, 1
      %s267 = scalar_select %p264, %s265, %s266
      %p270 = pneg %p264
      %p271 = scmp.eq.s32.totalorder %s27, 15
      %p272 = por %p270, %p271
      %p273 = scmp.ne.s32.totalorder %s265, %s268
      %p274 = scmp.eq.s32.totalorder %s27, 0
      %p275 = por %p273, %p274
      %p276 = scmp.ne.s32.totalorder %s265, %s268
      %p277 = scmp.eq.s32.totalorder %s32, 15
      %p278 = por %p276, %p277
      %p279 = scmp.ne.s32.totalorder %s268, %s269
      %p280 = scmp.eq.s32.totalorder %s32, 0
      %p281 = por %p279, %p280
      %p282 = scmp.ne.s32.totalorder %s268, %s269
      %p283 = scmp.eq.s32.totalorder %s33, 15
      %p284 = por %p282, %p283
      %p286 = scmp.ne.s32.totalorder %s269, %s285
      %p287 = scmp.eq.s32.totalorder %s33, 0
      %p288 = por %p286, %p287
      %p289 = scmp.le.s32.totalorder 1, %s27
      %p290 = scmp.lt.s32.totalorder %s27, 17
      %p291 = pnand %p289, %p290
      %p292 = pneg %p291
      // Predicated region
      $region9: #{dins_forward.1} parent=5 // pred_check
        _
      $region10: #{dins_forward.1} parent=5 // pred_check_branch
        %294 = sbr.rel (%p291) target = $region12
      $region11: #{dins_forward.1} parent=5 // pred_region
        %s295 = ssub.s32 %s27, 1
        // Predicated region
        $region13: #{dins_forward.1} parent=11 // pred_check
          %p296 = pneg %p148
        $region14: #{dins_forward.1} parent=11 // pred_check_branch
          %298 = sbr.rel (%p296) target = $region16
        $region15: #{dins_forward.1} parent=11 // pred_region
          %s300 = ssub.s32 256, 256
          %301 = vsyncadd [#allocation9], %s300
          %s302 = sshll.u32 [#allocation8], 4
          %s303 = int_to_ptr.vmem [resolvable:$true] %s302
          %308 = dma.hbm_to_vmem [thread:$0]  %s3, 256, %s303, [#allocation9], 64, 64, 4
        $region16: #{dins_forward.1} parent=11 // pred_fallthru
          _
        // Predicated region
        $region17: #{dins_forward.1} parent=11 // pred_check
          %p309 = pneg %p169
        $region18: #{dins_forward.1} parent=11 // pred_check_branch
          %311 = sbr.rel (%p309) target = $region20
        $region19: #{dins_forward.1} parent=11 // pred_region
          %s313 = ssub.s32 512, 512
          %314 = vsyncadd [#allocation9], %s313
          %s315 = sshll.u32 [#allocation10], 4
          %s316 = int_to_ptr.vmem [resolvable:$true] %s315
          %321 = dma.hbm_to_vmem [thread:$0]  %s4, 512, %s316, [#allocation9], 128, 128, 8
        $region20: #{dins_forward.1} parent=11 // pred_fallthru
          _
        // Predicated region
        $region21: #{dins_forward.1} parent=11 // pred_check
          %p322 = pneg %p190
        $region22: #{dins_forward.1} parent=11 // pred_check_branch
          %324 = sbr.rel (%p322) target = $region24
        $region23: #{dins_forward.1} parent=11 // pred_region
          %s326 = ssub.s32 32, 32
          %327 = vsyncadd [#allocation12], %s326
          %s329 = sshll.u32 [#allocation11], 4
          %s330 = int_to_ptr.vmem [resolvable:$true] %s329
          %332 = dma.hbm_to_vmem [thread:$0]  %s5, 32, %s330, [#allocation12]
        $region24: #{dins_forward.1} parent=11 // pred_fallthru
          _
        // Predicated region
        $region25: #{dins_forward.1} parent=11 // pred_check
          %p333 = pneg %p211
        $region26: #{dins_forward.1} parent=11 // pred_check_branch
          %335 = sbr.rel (%p333) target = $region28
        $region27: #{dins_forward.1} parent=11 // pred_region
          %s337 = ssub.s32 32, 32
          %338 = vsyncadd [#allocation12], %s337
          %s340 = sshll.u32 [#allocation13], 4
          %s341 = int_to_ptr.vmem [resolvable:$true] %s340
          %343 = dma.hbm_to_vmem [thread:$0]  %s6, 32, %s341, [#allocation12]
        $region28: #{dins_forward.1} parent=11 // pred_fallthru
          _
        // Predicated region
        $region29: #{dins_forward.1} parent=11 // pred_check
          %p344 = pneg %p232
        $region30: #{dins_forward.1} parent=11 // pred_check_branch
          %346 = sbr.rel (%p344) target = $region32
        $region31: #{dins_forward.1} parent=11 // pred_region
          %s348 = ssub.s32 16, 16
          %349 = vsyncadd [#allocation15], %s348
          %s351 = sshll.u32 [#allocation14], 4
          %s352 = int_to_ptr.vmem [resolvable:$true] %s351
          %354 = dma.hbm_to_vmem [thread:$0]  %s7, 16, %s352, [#allocation15]
        $region32: #{dins_forward.1} parent=11 // pred_fallthru
          _
        // Predicated region
        $region33: #{dins_forward.1} parent=11 // pred_check
          %p355 = pneg %p253
        $region34: #{dins_forward.1} parent=11 // pred_check_branch
          %357 = sbr.rel (%p355) target = $region36
        $region35: #{dins_forward.1} parent=11 // pred_region
          %s359 = ssub.s32 16, 16
          %360 = vsyncadd [#allocation15], %s359
          %s362 = sshll.u32 [#allocation16], 4
          %s363 = int_to_ptr.vmem [resolvable:$true] %s362
          %365 = dma.hbm_to_vmem [thread:$0]  %s8, 16, %s363, [#allocation15]
        $region36: #{dins_forward.1} parent=11 // pred_fallthru
          _
      $region12: #{dins_forward.1} parent=5 // pred_fallthru
        _
      %p366 = scmp.lt.s32.totalorder %s27, 16
      // Predicated region
      $region37: #{dins_forward.1} parent=5 // pred_check
        %p367 = pneg %p366
      $region38: #{dins_forward.1} parent=5 // pred_check_branch
        %369 = sbr.rel (%p367) target = $region40
      $region39: #{dins_forward.1} parent=5 // pred_region
        // Predicated region
        $region41: #{dins_forward.1} parent=39 // pred_check
          %p370 = pneg %p61
        $region42: #{dins_forward.1} parent=39 // pred_check_branch
          %372 = sbr.rel (%p370) target = $region44
        $region43: #{dins_forward.1} parent=39 // pred_region
          %s373 = sand.u32 %s51, 1
          %s374 = scalar_lea.sflag [#allocation3], %s373
          %s375 = sand.u32 %s51, 1
          %s376 = smul.addr %s375, 2
          %s377 = scalar_lea.vmem [#allocation2], %s376
          %s379 = ssub.s32 32, 32
          %380 = vsyncadd %s374, %s379
          %s381 = smul.addr %s34, 10
          %s382 = sadd.s32 %s35, %s381
          %s383 = smul.addr %s382, 32
          %s384 = scalar_lea.hbm %s0, %s383
          %s386 = sshll.u32 %s377, 4
          %s387 = int_to_ptr.vmem [resolvable:$true] %s386
          %389 = dma.hbm_to_vmem [thread:$0]  %s384, 32, %s387, %s374
        $region44: #{dins_forward.1} parent=39 // pred_fallthru
          _
        // Predicated region
        $region45: #{dins_forward.1} parent=39 // pred_check
          %p390 = pneg %p91
        $region46: #{dins_forward.1} parent=39 // pred_check_branch
          %392 = sbr.rel (%p390) target = $region48
        $region47: #{dins_forward.1} parent=39 // pred_region
          %s393 = sand.u32 %s27, 1
          %s394 = scalar_lea.sflag [#allocation6], %s393
          %s395 = sand.u32 %s81, 1
          %s396 = smul.addr %s395, 2
          %s397 = scalar_lea.vmem [#allocation5], %s396
          %s398 = sadd.s32 %s35, 1
          %s400 = ssub.s32 32, 32
          %401 = vsyncadd %s394, %s400
          %s402 = smul.addr %s34, 10
          %s403 = sadd.s32 %s398, %s402
          %s404 = smul.addr %s403, 32
          %s405 = scalar_lea.hbm %s1, %s404
          %s407 = sshll.u32 %s397, 4
          %s408 = int_to_ptr.vmem [resolvable:$true] %s407
          %410 = dma.hbm_to_vmem [thread:$0]  %s405, 32, %s408, %s394
        $region48: #{dins_forward.1} parent=39 // pred_fallthru
          _
        // Predicated region
        $region49: #{dins_forward.1} parent=39 // pred_check
          %p411 = pneg %p121
        $region50: #{dins_forward.1} parent=39 // pred_check_branch
          %413 = sbr.rel (%p411) target = $region52
        $region51: #{dins_forward.1} parent=39 // pred_region
          %s414 = sand.u32 %s27, 1
          %s415 = scalar_lea.sflag [#allocation6], %s414
          %s416 = sand.u32 %s111, 1
          %s417 = smul.addr %s416, 2
          %s418 = scalar_lea.vmem [#allocation7], %s417
          %s419 = sadd.s32 %s35, 2
          %s421 = ssub.s32 32, 32
          %422 = vsyncadd %s415, %s421
          %s423 = smul.addr %s34, 10
          %s424 = sadd.s32 %s419, %s423
          %s425 = smul.addr %s424, 32
          %s426 = scalar_lea.hbm %s2, %s425
          %s428 = sshll.u32 %s418, 4
          %s429 = int_to_ptr.vmem [resolvable:$true] %s428
          %431 = dma.hbm_to_vmem [thread:$0]  %s426, 32, %s429, %s415
        $region52: #{dins_forward.1} parent=39 // pred_fallthru
          _
      $region40: #{dins_forward.1} parent=5 // pred_fallthru
        _
      %p432 = scmp.le.s32.totalorder 1, %s27
      %p433 = scmp.lt.s32.totalorder %s27, 17
      %p434 = pnand %p432, %p433
      %p435 = pneg %p434
      // Predicated region
      $region53: #{dins_forward.1} parent=5 // pred_check
        _
      $region54: #{dins_forward.1} parent=5 // pred_check_branch
        %437 = sbr.rel (%p434) target = $region56
      $region55: #{dins_forward.1} parent=5 // pred_region
        %s438 = ssub.s32 %s27, 1
        %s439 = sand.u32 %s54, 1
        %s440 = scalar_lea.sflag [#allocation3], %s439
        %s441 = sand.u32 %s54, 1
        %s442 = smul.addr %s441, 2
        %s443 = scalar_lea.vmem [#allocation2], %s442
        // Predicated region
        $region57: #{dins_forward.1} parent=55 // pred_check
          %p444 = pneg %p67
        $region58: #{dins_forward.1} parent=55 // pred_check_branch
          %446 = sbr.rel (%p444) target = $region60
        $region59: #{dins_forward.1} parent=55 // pred_region
          %447 = dma.done %s440, 32
        $region60: #{dins_forward.1} parent=55 // pred_fallthru
          _
        %s448 = sand.u32 %s32, 1
        %s449 = scalar_lea.sflag [#allocation6], %s448
        %s450 = sand.u32 %s84, 1
        %s451 = smul.addr %s450, 2
        %s452 = scalar_lea.vmem [#allocation5], %s451
        // Predicated region
        $region61: #{dins_forward.1} parent=55 // pred_check
          %p453 = pneg %p97
        $region62: #{dins_forward.1} parent=55 // pred_check_branch
          %455 = sbr.rel (%p453) target = $region64
        $region63: #{dins_forward.1} parent=55 // pred_region
          %456 = dma.done %s449, 32
        $region64: #{dins_forward.1} parent=55 // pred_fallthru
          _
        %s457 = sand.u32 %s32, 1
        %s458 = scalar_lea.sflag [#allocation6], %s457
        %s459 = sand.u32 %s114, 1
        %s460 = smul.addr %s459, 2
        %s461 = scalar_lea.vmem [#allocation7], %s460
        // Predicated region
        $region65: #{dins_forward.1} parent=55 // pred_check
          %p462 = pneg %p127
        $region66: #{dins_forward.1} parent=55 // pred_check_branch
          %464 = sbr.rel (%p462) target = $region68
        $region67: #{dins_forward.1} parent=55 // pred_region
          %465 = dma.done %s458, 32
        $region68: #{dins_forward.1} parent=55 // pred_fallthru
          _
        // Predicated region
        $region69: #{dins_forward.1} parent=55 // pred_check
          %p466 = pneg %p148
        $region70: #{dins_forward.1} parent=55 // pred_check_branch
          %468 = sbr.rel (%p466) target = $region72
        $region71: #{dins_forward.1} parent=55 // pred_region
          %469 = dma.done [#allocation9], 256
        $region72: #{dins_forward.1} parent=55 // pred_fallthru
          _
        // Predicated region
        $region73: #{dins_forward.1} parent=55 // pred_check
          %p470 = pneg %p169
        $region74: #{dins_forward.1} parent=55 // pred_check_branch
          %472 = sbr.rel (%p470) target = $region76
        $region75: #{dins_forward.1} parent=55 // pred_region
          %473 = dma.done [#allocation9], 512
        $region76: #{dins_forward.1} parent=55 // pred_fallthru
          _
        // Predicated region
        $region77: #{dins_forward.1} parent=55 // pred_check
          %p474 = pneg %p190
        $region78: #{dins_forward.1} parent=55 // pred_check_branch
          %476 = sbr.rel (%p474) target = $region80
        $region79: #{dins_forward.1} parent=55 // pred_region
          %477 = dma.done [#allocation12], 32
        $region80: #{dins_forward.1} parent=55 // pred_fallthru
          _
        // Predicated region
        $region81: #{dins_forward.1} parent=55 // pred_check
          %p478 = pneg %p211
        $region82: #{dins_forward.1} parent=55 // pred_check_branch
          %480 = sbr.rel (%p478) target = $region84
        $region83: #{dins_forward.1} parent=55 // pred_region
          %481 = dma.done [#allocation12], 32
        $region84: #{dins_forward.1} parent=55 // pred_fallthru
          _
        // Predicated region
        $region85: #{dins_forward.1} parent=55 // pred_check
          %p482 = pneg %p232
        $region86: #{dins_forward.1} parent=55 // pred_check_branch
          %484 = sbr.rel (%p482) target = $region88
        $region87: #{dins_forward.1} parent=55 // pred_region
          %485 = dma.done [#allocation15], 16
        $region88: #{dins_forward.1} parent=55 // pred_fallthru
          _
        // Predicated region
        $region89: #{dins_forward.1} parent=55 // pred_check
          %p486 = pneg %p253
        $region90: #{dins_forward.1} parent=55 // pred_check_branch
          %488 = sbr.rel (%p486) target = $region92
        $region91: #{dins_forward.1} parent=55 // pred_region
          %489 = dma.done [#allocation15], 16
        $region92: #{dins_forward.1} parent=55 // pred_fallthru
          _
        %s490 = sand.u32 %s54, 1
        %s491 = scalar_lea.sflag [#allocation3], %s490
        %s492 = sand.u32 %s54, 1
        %s493 = smul.addr %s492, 2
        %s494 = scalar_lea.vmem [#allocation2], %s493
        %p495 = pneg %p67
        %p496 = pneg %p64
        %s497 = sand.u32 %s32, 1
        %s498 = scalar_lea.sflag [#allocation6], %s497
        %s499 = sand.u32 %s84, 1
        %s500 = smul.addr %s499, 2
        %s501 = scalar_lea.vmem [#allocation5], %s500
        %p502 = pneg %p97
        %p503 = pneg %p94
        %s504 = sand.u32 %s32, 1
        %s505 = scalar_lea.sflag [#allocation6], %s504
        %s506 = sand.u32 %s114, 1
        %s507 = smul.addr %s506, 2
        %s508 = scalar_lea.vmem [#allocation7], %s507
        %p509 = pneg %p127
        %p510 = pneg %p124
        %p511 = pneg %p148
        %p512 = pneg %p145
        %p513 = pneg %p169
        %p514 = pneg %p166
        %p515 = pneg %p190
        %p516 = pneg %p187
        %p517 = pneg %p211
        %p518 = pneg %p208
        %p519 = pneg %p232
        %p520 = pneg %p229
        %p521 = pneg %p253
        %p522 = pneg %p250
        %p523 = pneg %p281
        %p524 = pneg %p278
        %s525 = sand.u32 %s268, 1
        %s526 = scalar_lea.sflag [#allocation4], %s525
        %s527 = sand.u32 %s268, 1
        %s528 = smul.addr %s527, 2
        %s529 = scalar_lea.vmem [#allocation17], %s528
        %s530 = sadd.s32 %s37, 1
        %s531 = sadd.s32 %s37, 2
        %v533 = vld [vmem:[#allocation14] sm:$0x1]
        %v534 = vld [vmem:[#allocation16] sm:$0x1]
        %v535 = vld [vmem:[%s443] sm:$0x3]
        %v537 = vpack.i.b16 %v533, %v533
        %v539 = vlaneseq
        %v540 = vshrl.u32 %v539, 7
        %v541 = vsub.s32 0, %v540
        %v542 = vrot.slane %v537, %v541
        %v543 = vmul.bf16 %v535, %v542
        %v545 = vpack.i.b16 %v534, %v534
        %v547 = vlaneseq
        %v548 = vshrl.u32 %v547, 7
        %v549 = vsub.s32 0, %v548
        %v550 = vrot.slane %v545, %v549
        %v553 = vunpack.c.l.s4 1983009808
        %v554 = vunpack.c.0.s8 %v553
        %v555 = vlaneseq
        %v556 = vshrl.u32 %v555, 7
        %v557 = vsub.s32 %v554, %v556
        %v558 = vrot.slane %v550, %v557
        %559 = vrot.lane.b32.xlu0 %v558, 2
        %v560 = vpop.permute.xlu0 %559
        %v562 = vmul.bf16 %v535, %v560
        %v565 = vunpack.c.l.s4 1983009808
        %v566 = vunpack.c.0.s8 %v565
        %v567 = vlaneseq
        %v568 = vshrl.u32 %v567, 7
        %v569 = vsub.s32 %v566, %v568
        %v570 = vrot.slane %v542, %v569
        %571 = vrot.lane.b32.xlu0 %v570, 8
        %v572 = vpop.permute.xlu0 %571
        %v574 = vmul.bf16 %v535, %v572
        %575 = vrot.lane.b32.xlu0 %v558, 10
        %v576 = vpop.permute.xlu0 %575
        %v578 = vmul.bf16 %v535, %v576
        %579 = vrot.lane.b32.xlu0 %v570, 16
        %v580 = vpop.permute.xlu0 %579
        %v582 = vmul.bf16 %v535, %v580
        %583 = vrot.lane.b32.xlu0 %v558, 18
        %v584 = vpop.permute.xlu0 %583
        %v586 = vmul.bf16 %v535, %v584
        %v587 = vld [vmem:[%s452] sm:$0x3]
        %v588 = vmul.bf16 %v587, %v542
        %v589 = vmul.bf16 %v587, %v560
        %v590 = vmul.bf16 %v587, %v572
        %v591 = vmul.bf16 %v587, %v576
        %v592 = vmul.bf16 %v587, %v580
        %v593 = vmul.bf16 %v587, %v584
        %v594 = vld [vmem:[%s461] sm:$0x3]
        %v595 = vmul.bf16 %v594, %v542
        %v596 = vmul.bf16 %v594, %v560
        %v597 = vmul.bf16 %v594, %v572
        %v598 = vmul.bf16 %v594, %v576
        %v599 = vmul.bf16 %v594, %v580
        %v600 = vmul.bf16 %v594, %v584
        %v603 = vunpack.c.l.s4 1983009808
        %v604 = vunpack.c.0.s8 %v603
        %v605 = vlaneseq
        %v606 = vshrl.u32 %v605, 7
        %v607 = vsub.s32 %v604, %v606
        %v608 = vrot.slane %v535, %v607
        %v610 = vshrl.u32 %v608, 16
        %v612 = vrot.slane %v610, 6
        %v613 = vshll.u32 %v608, 16
        %v615 = vrot.slane %v613, 7
        %v616 = vor.u32 %v612, %v615
        %617 = vrot.lane.b32.xlu0 %v616, 127
        %v618 = vpop.permute.xlu0 %617
        %v622 = vunpack.c.l.s4 1983009808
        %v623 = vunpack.c.0.s8 %v622
        %v624 = vlaneseq
        %v625 = vshrl.u32 %v624, 7
        %v626 = vsub.s32 %v623, %v625
        %v627 = vrot.slane %v562, %v626
        %v628 = vrot.slane %v627, 5
        %629 = vrot.lane.b32.xlu0 %v628, 126
        %v630 = vpop.permute.xlu0 %629
        %v633 = vunpack.c.l.s4 1983009808
        %v634 = vunpack.c.0.s8 %v633
        %v635 = vlaneseq
        %v636 = vshrl.u32 %v635, 7
        %v637 = vsub.s32 %v634, %v636
        %v638 = vrot.slane %v574, %v637
        %v640 = vshrl.u32 %v638, 16
        %v642 = vrot.slane %v640, 3
        %v643 = vshll.u32 %v638, 16
        %v645 = vrot.slane %v643, 4
        %v646 = vor.u32 %v642, %v645
        %647 = vrot.lane.b32.xlu0 %v646, 120
        %v648 = vpop.permute.xlu0 %647
        %v650 = vcombine.low %v535, %v535
        %v652 = vunpack.c.l.s4 1983009808
        %v653 = vunpack.c.0.s8 %v652
        %v654 = vlaneseq
        %v655 = vshrl.u32 %v654, 7
        %v656 = vsub.s32 %v653, %v655
        %v657 = vrot.slane %v650, %v656
        %v658 = vcombine.low %v657, %v657
        %659 = vrot.lane.b32.xlu0 %v658, 119
        %v660 = vpop.permute.xlu0 %659
        %v663 = vunpack.c.l.s4 1983009808
        %v664 = vunpack.c.0.s8 %v663
        %v665 = vlaneseq
        %v666 = vshrl.u32 %v665, 7
        %v667 = vsub.s32 %v664, %v666
        %v668 = vrot.slane %v578, %v667
        %v670 = vshll.u32 %v668, 16
        %v672 = vrot.slane %v670, 1
        %v673 = vshrl.u32 %v668, 16
        %v675 = vor.u32 %v673, %v672
        %676 = vrot.lane.b32.xlu0 %v672, 118
        %v677 = vpop.permute.xlu0 %676
        %678 = vrot.lane.b32.xlu0 %v675, 118
        %v679 = vpop.permute.xlu0 %678
        %v683 = vunpack.c.l.s4 1983009808
        %v684 = vunpack.c.0.s8 %v683
        %v685 = vlaneseq
        %v686 = vshrl.u32 %v685, 7
        %v687 = vsub.s32 %v684, %v686
        %v688 = vrot.slane %v582, %v687
        %v689 = vrot.slane %v688, 7
        %690 = vrot.lane.b32.xlu0 %v689, 112
        %v691 = vpop.permute.xlu0 %690
        %v692 = vrot.slane %v610, 5
        %v693 = vrot.slane %v613, 6
        %v694 = vor.u32 %v692, %v693
        %695 = vrot.lane.b32.xlu0 %v694, 111
        %v696 = vpop.permute.xlu0 %695
        %v700 = vunpack.c.l.s4 1983009808
        %v701 = vunpack.c.0.s8 %v700
        %v702 = vlaneseq
        %v703 = vshrl.u32 %v702, 7
        %v704 = vsub.s32 %v701, %v703
        %v705 = vrot.slane %v586, %v704
        %v706 = vcombine.low %v705, %v705
        %707 = vrot.lane.b32.xlu0 %v706, 110
        %v708 = vpop.permute.xlu0 %707
        %v711 = vunpack.c.l.s4 1983009808
        %v712 = vunpack.c.0.s8 %v711
        %v713 = vlaneseq
        %v714 = vshrl.u32 %v713, 7
        %v715 = vsub.s32 %v712, %v714
        %v716 = vrot.slane %v588, %v715
        %v718 = vshrl.u32 %v716, 16
        %v720 = vrot.slane %v718, 2
        %v721 = vshll.u32 %v716, 16
        %v723 = vrot.slane %v721, 3
        %v724 = vor.u32 %v720, %v723
        %v728 = vunpack.c.l.s4 1983009808
        %v729 = vunpack.c.0.s8 %v728
        %v730 = vlaneseq
        %v731 = vshrl.u32 %v730, 7
        %v732 = vsub.s32 %v729, %v731
        %v733 = vrot.slane %v587, %v732
        %v734 = vrot.slane %v733, 1
        %735 = vrot.lane.b32.xlu0 %v734, 127
        %v736 = vpop.permute.xlu0 %735
        %v740 = vunpack.c.l.s4 1983009808
        %v741 = vunpack.c.0.s8 %v740
        %v742 = vlaneseq
        %v743 = vshrl.u32 %v742, 7
        %v744 = vsub.s32 %v741, %v743
        %v745 = vrot.slane %v589, %v744
        %v747 = vshrl.u32 %v745, 16
        %v749 = vrot.slane %v747, 7
        %v750 = vshll.u32 %v745, 16
        %v752 = vor.u32 %v749, %v750
        %753 = vrot.lane.b32.xlu0 %v752, 126
        %v754 = vpop.permute.xlu0 %753
        %v757 = vcombine.low %v590, %v590
        %v759 = vunpack.c.l.s4 1983009808
        %v760 = vunpack.c.0.s8 %v759
        %v761 = vlaneseq
        %v762 = vshrl.u32 %v761, 7
        %v763 = vsub.s32 %v760, %v762
        %v764 = vrot.slane %v757, %v763
        %765 = vrot.lane.b32.xlu0 %v764, 120
        %v766 = vpop.permute.xlu0 %765
        %v768 = vshrl.u32 %v733, 16
        %v770 = vrot.slane %v768, 4
        %v771 = vshll.u32 %v733, 16
        %v773 = vrot.slane %v771, 5
        %v774 = vor.u32 %v770, %v773
        %775 = vrot.lane.b32.xlu0 %v774, 119
        %v776 = vpop.permute.xlu0 %775
        %v780 = vunpack.c.l.s4 1983009808
        %v781 = vunpack.c.0.s8 %v780
        %v782 = vlaneseq
        %v783 = vshrl.u32 %v782, 7
        %v784 = vsub.s32 %v781, %v783
        %v785 = vrot.slane %v591, %v784
        %v786 = vrot.slane %v785, 3
        %787 = vrot.lane.b32.xlu0 %v786, 118
        %v788 = vpop.permute.xlu0 %787
        %v791 = vunpack.c.l.s4 1983009808
        %v792 = vunpack.c.0.s8 %v791
        %v793 = vlaneseq
        %v794 = vshrl.u32 %v793, 7
        %v795 = vsub.s32 %v792, %v794
        %v796 = vrot.slane %v592, %v795
        %v798 = vshrl.u32 %v796, 16
        %v800 = vrot.slane %v798, 1
        %v801 = vshll.u32 %v796, 16
        %v803 = vrot.slane %v801, 2
        %v804 = vor.u32 %v800, %v803
        %805 = vrot.lane.b32.xlu0 %v804, 112
        %v806 = vpop.permute.xlu0 %805
        %vm808 = vcmask 1041408
        %vm809 = vsmask.f32 1280
        %vm810 = vmand %vm808, %vm809
        %v811 = vsel %vm810, %v543, %v618
        %vm812 = vcmask 1042432
        %v815 = vsel %vm812, %v811, %v630
        %vm817 = vcmask 1044480
        %vm818 = vsmask.f32 4352
        %vm819 = vmand %vm817, %vm818
        %v820 = vsel %vm819, %v815, %v648
        %vm821 = vcmask 1045504
        %v824 = vsel %vm821, %v820, %v660
        %vm826 = vcmask 1047552
        %vm827 = vsmask.f32 7424
        %vm828 = vmand %vm826, %vm827
        %v829 = vsel %vm828, %v824, %v677
        %vm830 = vcmask 1040384
        %v833 = vsel %vm830, %v679, %v691
        %vm835 = vcmask 1042432
        %vm836 = vsmask.f32 2304
        %vm837 = vmand %vm835, %vm836
        %v838 = vsel %vm837, %v833, %v696
        %vm839 = vcmask 1043456
        %v842 = vsel %vm839, %v838, %v708
        %vm844 = vcmask 1045504
        %vm845 = vsmask.f32 5376
        %vm846 = vmand %vm844, %vm845
        %v847 = vsel %vm846, %v842, %v724
        %vm848 = vcmask 1046528
        %v851 = vsel %vm848, %v847, %v736
        %vm853 = vcmask 1040384
        %vm854 = vsmask.f32 256
        %vm855 = vmand %vm853, %vm854
        %v856 = vsel %vm855, %v736, %v754
        %vm857 = vcmask 1041408
        %v860 = vsel %vm857, %v856, %v766
        %vm862 = vcmask 1043456
        %vm863 = vsmask.f32 3328
        %vm864 = vmand %vm862, %vm863
        %v865 = vsel %vm864, %v860, %v776
        %vm866 = vcmask 1044480
        %v869 = vsel %vm866, %v865, %v788
        %vm871 = vcmask 1046528
        %vm872 = vsmask.f32 6400
        %vm873 = vmand %vm871, %vm872
        %v874 = vsel %vm873, %v869, %v806
        %v877 = vunpack.c.l.s4 1983009808
        %v878 = vunpack.c.0.s8 %v877
        %v879 = vlaneseq
        %v880 = vshrl.u32 %v879, 7
        %v881 = vsub.s32 %v878, %v880
        %v882 = vrot.slane %v593, %v881
        %v884 = vshrl.u32 %v882, 16
        %v886 = vrot.slane %v884, 6
        %v887 = vshll.u32 %v882, 16
        %v889 = vrot.slane %v887, 7
        %v890 = vor.u32 %v886, %v889
        %891 = vrot.lane.b32.xlu0 %v890, 127
        %v892 = vpop.permute.xlu0 %891
        %v896 = vunpack.c.l.s4 1983009808
        %v897 = vunpack.c.0.s8 %v896
        %v898 = vlaneseq
        %v899 = vshrl.u32 %v898, 7
        %v900 = vsub.s32 %v897, %v899
        %v901 = vrot.slane %v595, %v900
        %v902 = vrot.slane %v901, 5
        %903 = vrot.lane.b32.xlu0 %v902, 17
        %v904 = vpop.permute.xlu0 %903
        %v907 = vunpack.c.l.s4 1983009808
        %v908 = vunpack.c.0.s8 %v907
        %v909 = vlaneseq
        %v910 = vshrl.u32 %v909, 7
        %v911 = vsub.s32 %v908, %v910
        %v912 = vrot.slane %v594, %v911
        %v914 = vshrl.u32 %v912, 16
        %v916 = vrot.slane %v914, 3
        %v917 = vshll.u32 %v912, 16
        %v919 = vrot.slane %v917, 4
        %v920 = vor.u32 %v916, %v919
        %921 = vrot.lane.b32.xlu0 %v920, 16
        %v922 = vpop.permute.xlu0 %921
        %v925 = vcombine.low %v596, %v596
        %v927 = vunpack.c.l.s4 1983009808
        %v928 = vunpack.c.0.s8 %v927
        %v929 = vlaneseq
        %v930 = vshrl.u32 %v929, 7
        %v931 = vsub.s32 %v928, %v930
        %v932 = vrot.slane %v925, %v931
        %v933 = vcombine.low %v932, %v932
        %934 = vrot.lane.b32.xlu0 %v933, 15
        %v935 = vpop.permute.xlu0 %934
        %v938 = vunpack.c.l.s4 1983009808
        %v939 = vunpack.c.0.s8 %v938
        %v940 = vlaneseq
        %v941 = vshrl.u32 %v940, 7
        %v942 = vsub.s32 %v939, %v941
        %v943 = vrot.slane %v597, %v942
        %v945 = vshll.u32 %v943, 16
        %v947 = vrot.slane %v945, 1
        %v948 = vshrl.u32 %v943, 16
        %v950 = vor.u32 %v948, %v947
        %951 = vrot.lane.b32.xlu0 %v947, 9
        %v952 = vpop.permute.xlu0 %951
        %953 = vrot.lane.b32.xlu0 %v950, 9
        %v954 = vpop.permute.xlu0 %953
        %v956 = vrot.slane %v912, 7
        %957 = vrot.lane.b32.xlu0 %v956, 8
        %v958 = vpop.permute.xlu0 %957
        %v961 = vunpack.c.l.s4 1983009808
        %v962 = vunpack.c.0.s8 %v961
        %v963 = vlaneseq
        %v964 = vshrl.u32 %v963, 7
        %v965 = vsub.s32 %v962, %v964
        %v966 = vrot.slane %v598, %v965
        %v968 = vshrl.u32 %v966, 16
        %v970 = vrot.slane %v968, 5
        %v971 = vshll.u32 %v966, 16
        %v973 = vrot.slane %v971, 6
        %v974 = vor.u32 %v970, %v973
        %975 = vrot.lane.b32.xlu0 %v974, 7
        %v976 = vpop.permute.xlu0 %975
        %v980 = vunpack.c.l.s4 1983009808
        %v981 = vunpack.c.0.s8 %v980
        %v982 = vlaneseq
        %v983 = vshrl.u32 %v982, 7
        %v984 = vsub.s32 %v981, %v983
        %v985 = vrot.slane %v599, %v984
        %v986 = vcombine.low %v985, %v985
        %987 = vrot.lane.b32.xlu0 %v986, 1
        %v988 = vpop.permute.xlu0 %987
        %v989 = vrot.slane %v914, 2
        %v990 = vrot.slane %v917, 3
        %v991 = vor.u32 %v989, %v990
        %v995 = vunpack.c.l.s4 1983009808
        %v996 = vunpack.c.0.s8 %v995
        %v997 = vlaneseq
        %v998 = vshrl.u32 %v997, 7
        %v999 = vsub.s32 %v996, %v998
        %v1000 = vrot.slane %v600, %v999
        %v1001 = vrot.slane %v1000, 1
        %1002 = vrot.lane.b32.xlu0 %v1001, 127
        %v1003 = vpop.permute.xlu0 %1002
        %v1004 = vsel %vm810, %v587, %v892
        %v1007 = vsel %vm812, %v1004, %v904
        %v1009 = vsel %vm819, %v1007, %v922
        %v1012 = vsel %vm821, %v1009, %v935
        %v1014 = vsel %vm828, %v1012, %v952
        %v1017 = vsel %vm830, %v954, %v958
        %v1019 = vsel %vm837, %v1017, %v976
        %v1022 = vsel %vm839, %v1019, %v988
        %v1024 = vsel %vm846, %v1022, %v991
        %v1027 = vsel %vm848, %v1024, %v1003
        %1030 = vrot.lane.b32.xlu0 %v1014, 111
        %v1031 = vpop.permute.xlu0 %1030
        %1032 = vrot.lane.b32.xlu0 %v1027, 111
        %v1033 = vpop.permute.xlu0 %1032
        %1034 = vrot.lane.b32.xlu0 %v1003, 111
        %v1035 = vpop.permute.xlu0 %1034
        %v1038 = vld [vmem:[#allocation8] sm:$0xf]
        %v1039 = vld [vmem:[#allocation8 + $0x4] sm:$0xf]
        %v1040 = vld [vmem:[#allocation8 + $0x8] sm:$0xf]
        %v1041 = vld [vmem:[#allocation8 + $0xc] sm:$0xf]
        %v1042 = vld [vmem:[#allocation10] sm:$0xff]
        %v1043 = vld [vmem:[#allocation10 + $0x8] sm:$0xff]
        %v1044 = vld [vmem:[#allocation10 + $0x10] sm:$0xff]
        %v1045 = vld [vmem:[#allocation10 + $0x18] sm:$0xff]
        %1047 = vset.pattern.permute.xlu0 0
        %1048 = vperm.xlu0 %1047, %v1042
        %v1049 = vpop.permute.xlu0 %1048
        %1052 = vset.pattern.permute.xlu0 0
        %1053 = vperm.xlu0 %1052, %v1043
        %v1054 = vpop.permute.xlu0 %1053
        %1057 = vset.pattern.permute.xlu0 0
        %1058 = vperm.xlu0 %1057, %v1044
        %v1059 = vpop.permute.xlu0 %1058
        %1062 = vset.pattern.permute.xlu0 0
        %1063 = vperm.xlu0 %1062, %v1045
        %v1064 = vpop.permute.xlu0 %1063
        %v1070 = vunpack.c.l.b16 %v1038
        %v1071 = vunpack.c.l.b16 %v1039
        %v1072 = vunpack.c.l.b16 %v1040
        %v1073 = vunpack.c.l.b16 %v1041
        %v1074 = vpack.c.b16 %v1071, %v1070
        %v1075 = vpack.c.b16 %v1073, %v1072
        %vm1076 = vcmask 662528
        %v1078 = vsel %vm1076, %v1074, 0
        %v1081 = vsel %vm1076, %v1075, 0
        %v1083 = vsel 0, 4294967295, 65535
        %v1084 = vsel %vm830, %v1083, 0
        %v1086 = vand.u32 %v1035, %v1084
        %1088 = vmatprep.subr.bf16.mxu0 0
        %1089 = vmatpush1.bf16.msra.mxu0 %v829
        %1090 = vmatprep.subr.bf16.mxu0 0
        %1091 = vmatpush1.bf16.msra.mxu0 %v851
        %1092 = vmatprep.subr.bf16.mxu0 0
        %1093 = vmatpush1.bf16.msra.mxu0 %v874
        %1094 = vmatprep.subr.bf16.mxu0 0
        %1095 = vmatpush1.bf16.msra.mxu0 %v1031
        %1096 = vmatprep.subr.bf16.mxu0 0
        %1097 = vmatpush1.bf16.msra.mxu0 %v1033
        %1098 = vmatprep.subr.bf16.mxu0 0
        %1099 = vmatpush1.bf16.msra.mxu0 %v1086
        %1100 = vmatprep.subr.bf16.mxu0 0
        %1101 = vmatpush1.bf16.msra.mxu0 0
        %1102 = vmatprep.subr.bf16.mxu0 0
        %1103 = vmatpush1.bf16.msra.mxu0 0
        %1104 = vmatprep.subr.bf16.mxu0 0
        %1105 = vmatpush1.bf16.msra.mxu0 0
        %1106 = vmatprep.subr.bf16.mxu0 0
        %1107 = vmatpush1.bf16.msra.mxu0 0
        %1108 = vmatprep.subr.bf16.mxu0 0
        %1109 = vmatpush1.bf16.msra.mxu0 0
        %1110 = vmatprep.subr.bf16.mxu0 0
        %1111 = vmatpush1.bf16.msra.mxu0 0
        %1112 = vmatprep.subr.bf16.mxu0 0
        %1113 = vmatpush1.bf16.msra.mxu0 0
        %1114 = vmatprep.subr.bf16.mxu0 0
        %1115 = vmatpush1.bf16.msra.mxu0 0
        %1116 = vmatprep.subr.bf16.mxu0 0
        %1117 = vmatpush1.bf16.msra.mxu0 0
        %1118 = vmatprep.subr.bf16.mxu0 0
        %1119 = vmatpush1.bf16.msra.mxu0 0
        %1120 = vmatprep.mubr.bf16.mxu0 0
        %1121 = vmatmul.mubr.bf16.gmra.mrb[0].mxu0 %v1078
        %v1122 = vpop.f32.mrb[0].mxu0
        %v1123 = vadd.f32 %v1049, %v1122
        %v1124 = vpop.f32.mrb[0].mxu0
        %v1125 = vpop.f32.mrb[0].mxu0
        %v1126 = vadd.f32 %v1054, %v1125
        %v1127 = vpop.f32.mrb[0].mxu0
        %1128 = vmatprep.mubr.bf16.mxu0 0
        %1129 = vmatmul.mubr.bf16.gmra.mrb[0].mxu0 %v1081
        %v1130 = vpop.f32.mrb[0].mxu0
        %v1131 = vadd.f32 %v1059, %v1130
        %v1132 = vpop.f32.mrb[0].mxu0
        %v1133 = vpop.f32.mrb[0].mxu0
        %v1134 = vadd.f32 %v1064, %v1133
        %v1135 = vpop.f32.mrb[0].mxu0
        %1136 = vdwg.mxu0
        %v1137 = vmax.f32 %v1123, 0.0
        %v1138 = vmax.f32 %v1126, 0.0
        %v1139 = vmax.f32 %v1131, 0.0
        %v1140 = vmax.f32 %v1134, 0.0
        %v1141 = vld [vmem:[#allocation11] sm:$0x3]
        %v1142 = vld [vmem:[#allocation13] sm:$0x3]
        %1144 = vset.pattern.permute.xlu0 0
        %1145 = vperm.xlu0 %1144, %v1142
        %v1146 = vpop.permute.xlu0 %1145
        %vm1148 = vcmask 261120
        %v1150 = vsel %vm1148, %v1141, 0
        %1152 = vmatprep.subr.mxu0 0.0
        %1153 = vmatpush1.msra.mxu0 %v1137
        %1154 = vmatprep.subr.mxu0 0.0
        %1155 = vmatpush1.msra.mxu0 %v1138
        %1156 = vmatprep.subr.mxu0 0.0
        %1157 = vmatpush1.msra.mxu0 %v1139
        %1158 = vmatprep.subr.mxu0 0.0
        %1159 = vmatpush1.msra.mxu0 %v1140
        %1160 = vmatprep.subr.mxu0 0.0
        %1161 = vmatpush1.msra.mxu0 0.0
        %1162 = vmatprep.subr.mxu0 0.0
        %1163 = vmatpush1.msra.mxu0 0.0
        %1164 = vmatprep.subr.mxu0 0.0
        %1165 = vmatpush1.msra.mxu0 0.0
        %1166 = vmatprep.subr.mxu0 0.0
        %1167 = vmatpush1.msra.mxu0 0.0
        %1168 = vmatprep.subr.mxu0 0.0
        %1169 = vmatpush1.msra.mxu0 0.0
        %1170 = vmatprep.subr.mxu0 0.0
        %1171 = vmatpush1.msra.mxu0 0.0
        %1172 = vmatprep.subr.mxu0 0.0
        %1173 = vmatpush1.msra.mxu0 0.0
        %1174 = vmatprep.subr.mxu0 0.0
        %1175 = vmatpush1.msra.mxu0 0.0
        %1176 = vmatprep.subr.mxu0 0.0
        %1177 = vmatpush1.msra.mxu0 0.0
        %1178 = vmatprep.subr.mxu0 0.0
        %1179 = vmatpush1.msra.mxu0 0.0
        %1180 = vmatprep.subr.mxu0 0.0
        %1181 = vmatpush1.msra.mxu0 0.0
        %1182 = vmatprep.subr.mxu0 0.0
        %1183 = vmatpush1.msra.mxu0 0.0
        %1184 = vmatprep.subr.mxu0 0.0
        %1185 = vmatpush1.msra.mxu0 0.0
        %1186 = vmatprep.subr.mxu0 0.0
        %1187 = vmatpush1.msra.mxu0 0.0
        %1188 = vmatprep.subr.mxu0 0.0
        %1189 = vmatpush1.msra.mxu0 0.0
        %1190 = vmatprep.subr.mxu0 0.0
        %1191 = vmatpush1.msra.mxu0 0.0
        %1192 = vmatprep.subr.mxu0 0.0
        %1193 = vmatpush1.msra.mxu0 0.0
        %1194 = vmatprep.subr.mxu0 0.0
        %1195 = vmatpush1.msra.mxu0 0.0
        %1196 = vmatprep.subr.mxu0 0.0
        %1197 = vmatpush1.msra.mxu0 0.0
        %1198 = vmatprep.subr.mxu0 0.0
        %1199 = vmatpush1.msra.mxu0 0.0
        %1200 = vmatprep.subr.mxu0 0.0
        %1201 = vmatpush1.msra.mxu0 0.0
        %1202 = vmatprep.subr.mxu0 0.0
        %1203 = vmatpush1.msra.mxu0 0.0
        %1204 = vmatprep.subr.mxu0 0.0
        %1205 = vmatpush1.msra.mxu0 0.0
        %1206 = vmatprep.subr.mxu0 0.0
        %1207 = vmatpush1.msra.mxu0 0.0
        %1208 = vmatprep.subr.mxu0 0.0
        %1209 = vmatpush1.msra.mxu0 0.0
        %1210 = vmatprep.subr.mxu0 0.0
        %1211 = vmatpush1.msra.mxu0 0.0
        %1212 = vmatprep.subr.mxu0 0.0
        %1213 = vmatpush1.msra.mxu0 0.0
        %1214 = vmatprep.subr.mxu0 0.0
        %1215 = vmatpush1.msra.mxu0 0.0
        %1216 = vmatprep.mubr.f32.mxu0 0.0
        %1217 = vmatmul.mubr.f32.gmra.mrb[0].mxu0 %v1150
        %v1218 = vpop.f32.mrb[0].mxu0
        %v1219 = vadd.f32 %v1146, %v1218
        %v1220 = vpop.f32.mrb[0].mxu0
        %1221 = vdwg.mxu0
        %vm1222 = vcmask 517120
        %1223 = vst.msk [vmem:[%s529] sm:$0x3] %vm1222, %v1219
        %s1224 = sand.u32 %s268, 1
        %s1225 = scalar_lea.sflag [#allocation4], %s1224
        %s1226 = sand.u32 %s268, 1
        %s1227 = smul.addr %s1226, 2
        %s1228 = scalar_lea.vmem [#allocation17], %s1227
        // Predicated region
        $region93: #{dins_forward.1} parent=55 // pred_check
          %p1229 = pneg %p278
        $region94: #{dins_forward.1} parent=55 // pred_check_branch
          %1231 = sbr.rel (%p1229) target = $region96
        $region95: #{dins_forward.1} parent=55 // pred_region
          %s1233 = ssub.s32 32, 32
          %1234 = vsyncadd %s1225, %s1233
          %s1235 = smul.addr %s36, 8
          %s1236 = sadd.s32 %s37, %s1235
          %s1237 = smul.addr %s1236, 32
          %s1238 = scalar_lea.hbm %s9, %s1237
          %s1240 = sshll.u32 %s1228, 4
          %s1241 = int_to_ptr.vmem [resolvable:$true] %s1240
          %1243 = dma.vmem_to_hbm [thread:$0]  %s1241, 32, %s1238, %s1225
        $region96: #{dins_forward.1} parent=55 // pred_fallthru
          _
      $region56: #{dins_forward.1} parent=5 // pred_fallthru
        _
      %p1244 = scmp.le.s32.totalorder 2, %s27
      // Predicated region
      $region97: #{dins_forward.1} parent=5 // pred_check
        %p1245 = pneg %p1244
      $region98: #{dins_forward.1} parent=5 // pred_check_branch
        %1247 = sbr.rel (%p1245) target = $region100
      $region99: #{dins_forward.1} parent=5 // pred_region
        %s1248 = ssub.s32 %s27, 2
        // Predicated region
        $region101: #{dins_forward.1} parent=99 // pred_check
          %p1249 = pneg %p284
        $region102: #{dins_forward.1} parent=99 // pred_check_branch
          %1251 = sbr.rel (%p1249) target = $region104
        $region103: #{dins_forward.1} parent=99 // pred_region
          %s1252 = sand.u32 %s269, 1
          %s1253 = scalar_lea.sflag [#allocation4], %s1252
          %s1254 = sand.u32 %s269, 1
          %s1255 = smul.addr %s1254, 2
          %s1256 = scalar_lea.vmem [#allocation17], %s1255
          %1257 = dma.done %s1253, 32
        $region104: #{dins_forward.1} parent=99 // pred_fallthru
          _
      $region100: #{dins_forward.1} parent=5 // pred_fallthru
        _
    $region6: #{dins_forward.1} parent=1 // loop_footer
      %s31 = sadd.s32 1, %s27
    $region7: #{dins_forward.1} parent=1 // loop_footer_branch
      %26 = sbr.rel target = $region3
    $region8: #{dins_forward.1} parent=1 // loop_exit
      _
    %1258 = vsyncpa [#allocation3], 1
    %s1259 = scalar_lea.sflag [#allocation3], 1
    %1260 = vsyncpa %s1259, 1
    %1261 = vsyncpa [#allocation6], 1
    %s1262 = scalar_lea.sflag [#allocation6], 1
    %1263 = vsyncpa %s1262, 1
    %1264 = vsyncpa [#allocation9], 1
    %1265 = vsyncpa [#allocation12], 1
    %1266 = vsyncpa [#allocation15], 1
    %1267 = vsyncpa [#allocation4], 1
    %s1268 = scalar_lea.sflag [#allocation4], 1
    %1269 = vsyncpa %s1268, 1

</llo_original>
